<compile_context>
chip_gen: v6e
topology: v6e:2x2x1
jax: 0.10.0
libtpu: 0.0.40
codegen_flags: <defaults>
</compile_context>

<pallas_src>
import functools

import jax
import jax.numpy as jnp
from jax.experimental import pallas as pl
from jax.experimental.pallas import tpu as pltpu


def _round_up(v, m):
    return ((v + m - 1) // m) * m


def _pad2(a, rows, cols):
    return jnp.pad(a, ((0, rows - a.shape[0]), (0, cols - a.shape[1])))


# ---------------------------------------------------------------------------
# Fused small-graph path: adjacency VMEM-resident, all three layers in one
# pallas_call (single invocation, whole arrays in VMEM).
# ---------------------------------------------------------------------------
def _fused_decoder_kernel(x_ref, adj_ref, w1_ref, w2_ref, w3_ref, out_ref):
    adj = adj_ref[...]                                     # bf16, VMEM-resident
    s = jnp.tanh(jnp.dot(x_ref[...], w1_ref[...],
                         preferred_element_type=jnp.float32))
    z = jnp.dot(adj, s.astype(jnp.bfloat16), preferred_element_type=jnp.float32)
    s = jnp.tanh(jnp.dot(z.astype(jnp.bfloat16), w2_ref[...],
                         preferred_element_type=jnp.float32))
    z = jnp.dot(adj, s.astype(jnp.bfloat16), preferred_element_type=jnp.float32)
    s = jnp.dot(z.astype(jnp.bfloat16), w3_ref[...],
                preferred_element_type=jnp.float32)
    out_ref[...] = jnp.dot(adj, s.astype(jnp.bfloat16),
                           preferred_element_type=jnp.float32
                           ).astype(out_ref.dtype)


def _fused_decoder(x_b, adj_b, w1_b, w2_b, w3_b):
    n_pad = adj_b.shape[0]
    f4 = w3_b.shape[1]
    # No grid: kernel runs once with every array whole in VMEM (adj read once).
    return pl.pallas_call(
        _fused_decoder_kernel,
        out_shape=jax.ShapeDtypeStruct((n_pad, f4), jnp.float32),
    )(x_b, adj_b, w1_b, w2_b, w3_b)


# ---------------------------------------------------------------------------
# Tiled large-graph path.
# ---------------------------------------------------------------------------
def _support_kernel(x_ref, w_ref, s_ref, *, activate):
    """s = act(x @ W) for one row block; x/W bf16, s bf16, f32 accumulate."""
    s = jnp.dot(x_ref[...], w_ref[...], preferred_element_type=jnp.float32)
    if activate:
        s = jnp.tanh(s)
    s_ref[...] = s.astype(s_ref.dtype)


def _support(x_b, w_b, *, activate, ts):
    n_pad, f_in = x_b.shape
    f_out = w_b.shape[1]
    kernel = functools.partial(_support_kernel, activate=activate)
    return pl.pallas_call(
        kernel,
        out_shape=jax.ShapeDtypeStruct((n_pad, f_out), jnp.bfloat16),
        grid=(n_pad // ts,),
        in_specs=[
            pl.BlockSpec((ts, f_in), lambda i: (i, 0)),      # row block of x
            pl.BlockSpec((f_in, f_out), lambda i: (0, 0)),   # full W, resident
        ],
        out_specs=pl.BlockSpec((ts, f_out), lambda i: (i, 0)),
        compiler_params=pltpu.CompilerParams(
            dimension_semantics=("parallel",)),
    )(x_b, w_b)


def _aggregate_kernel(adj_ref, s_ref, out_ref, acc_ref, *, tk, s_resident):
    """acc += adj[i_blk, k_blk] @ s[k_blk]; finalize on last k."""
    k = pl.program_id(1)

    @pl.when(k == 0)
    def _():
        acc_ref[...] = jnp.zeros_like(acc_ref)

    if s_resident:
        start = pl.multiple_of(k * tk, tk)
        s_blk = s_ref[pl.ds(start, tk), :]
    else:
        s_blk = s_ref[...]

    acc_ref[...] += jnp.dot(adj_ref[...], s_blk,
                            preferred_element_type=jnp.float32)

    @pl.when(k == pl.num_programs(1) - 1)
    def _():
        out_ref[...] = acc_ref[...].astype(out_ref.dtype)


def _aggregate(adj_b, s_b, *, tm, tk, s_resident, out_dtype):
    n_pad = adj_b.shape[0]
    f_out = s_b.shape[1]
    kernel = functools.partial(_aggregate_kernel, tk=tk, s_resident=s_resident)
    if s_resident:
        # Whole s held in VMEM for the entire layer (no per-i re-stream).
        s_spec = pl.BlockSpec((n_pad, f_out), lambda i, k: (0, 0))
    else:
        s_spec = pl.BlockSpec((tk, f_out), lambda i, k: (k, 0))
    return pl.pallas_call(
        kernel,
        out_shape=jax.ShapeDtypeStruct((n_pad, f_out), out_dtype),
        grid=(n_pad // tm, n_pad // tk),
        in_specs=[
            pl.BlockSpec((tm, tk), lambda i, k: (i, k)),     # adjacency tile
            s_spec,
        ],
        out_specs=pl.BlockSpec((tm, f_out), lambda i, k: (i, 0)),
        scratch_shapes=[pltpu.VMEM((tm, f_out), jnp.float32)],
        compiler_params=pltpu.CompilerParams(
            dimension_semantics=("parallel", "arbitrary")),
    )(adj_b, s_b)


# ---------------------------------------------------------------------------
# Wrapper.
# ---------------------------------------------------------------------------
_FUSED_MAX_NPAD = 2048            # bf16 adj <= 8 MiB -> keep adj VMEM-resident
_S_RESIDENT_MAX_BYTES = 4 << 20   # keep resident s under ~4 MiB (v7x headroom)


def igae_decoder(x, adj, w1, w2, w3, *,
                 _force_tiled=False, _tile_m=None, _tile_k=None,
                 _s_resident=None):
    """IGAE_decoder forward.  x:[N,F1]  adj:[N,N]  w_l:[F_in,F_out]."""
    n = x.shape[0]
    hidden_dim = w3.shape[1]

    f1 = _round_up(w1.shape[0], 128)   # gae_n_dec_1
    f2 = _round_up(w1.shape[1], 128)   # gae_n_dec_2
    f3 = _round_up(w2.shape[1], 128)   # gae_n_dec_3
    f4 = _round_up(w3.shape[1], 128)   # hidden_dim

    w1_b = _pad2(w1, f1, f2).astype(jnp.bfloat16)
    w2_b = _pad2(w2, f2, f3).astype(jnp.bfloat16)
    w3_b = _pad2(w3, f3, f4).astype(jnp.bfloat16)

    use_fused = (not _force_tiled) and (
        _round_up(max(n, 8), 256) <= _FUSED_MAX_NPAD)
    n_pad = _round_up(max(n, 8), 256 if use_fused else 512)

    # If the decoder is called repeatedly with the same adjacency, pass in a
    # pre-padded bf16 adjacency of shape (n_pad, n_pad) to skip this full
    # O(N^2) pad+cast HBM pass.
    if adj.shape == (n_pad, n_pad) and adj.dtype == jnp.bfloat16:
        adj_b = adj
    else:
        adj_b = _pad2(adj, n_pad, n_pad).astype(jnp.bfloat16)

    x_b = _pad2(x, n_pad, f1).astype(jnp.bfloat16)

    # Zero padding is exact: tanh(0)=0 and padded adj rows/cols are zero, so
    # padded rows/cols of every intermediate stay zero.
    if use_fused:
        z = _fused_decoder(x_b, adj_b, w1_b, w2_b, w3_b)
        return z[:n, :hidden_dim]

    # ------------------------------ tiled path ------------------------------
    tm = _tile_m if _tile_m is not None else (512 if n_pad >= 1024 else 256)
    if _tile_k is not None:
        tk = _tile_k
    else:
        tk = max(t for t in (2048, 1536, 1024, 768, 512) if n_pad % t == 0)
    ts = min(512, n_pad)

    def layer(z_in, w_b, activate, out_dtype):
        s = _support(z_in, w_b, activate=activate, ts=ts)   # bf16 [n_pad,f_out]
        f_out = w_b.shape[1]
        if _s_resident is None:
            s_res = n_pad * f_out * 2 <= _S_RESIDENT_MAX_BYTES
        else:
            s_res = _s_resident
        return _aggregate(adj_b, s, tm=tm, tk=tk, s_resident=s_res,
                          out_dtype=out_dtype)

    z = layer(x_b, w1_b, True, jnp.bfloat16)    # bf16 inter-layer activations
    z = layer(z, w2_b, True, jnp.bfloat16)
    z = layer(z, w3_b, False, jnp.float32)      # final output in f32
    return z[:n, :hidden_dim]


# ---------------------------------------------------------------------------
# Reference & test harness.
# ---------------------------------------------------------------------------
def _xavier_uniform(key, shape, dtype=jnp.float32):
    fan_in, fan_out = shape
    limit = jnp.sqrt(6.0 / (fan_in + fan_out))
    return jax.random.uniform(key, shape, dtype, minval=-limit, maxval=limit)


def _reference(x, adj, w1, w2, w3):
    z = adj @ jnp.tanh(x @ w1)
    z = adj @ jnp.tanh(z @ w2)
    return adj @ (z @ w3)


def _make_inputs(key, n, d1, d2, d3, hidden):
    kx, kadj, k1, k2, k3 = jax.random.split(key, 5)
    x = jax.random.normal(kx, (n, d1), dtype=jnp.float32)
    a = jax.random.uniform(kadj, (n, n), dtype=jnp.float32)
    a = (a + a.T) * 0.5 + jnp.eye(n, dtype=jnp.float32)
    adj = a / jnp.sum(a, axis=1, keepdims=True)   # row-normalized dense adj
    w1 = _xavier_uniform(k1, (d1, d2))
    w2 = _xavier_uniform(k2, (d2, d3))
    w3 = _xavier_uniform(k3, (d3, hidden))
    return x, adj, w1, w2, w3


if __name__ == "__main__":
    key = jax.random.PRNGKey(0)
    k_small, k_mid = jax.random.split(key)

    N, d1, d2, d3, hidden = 16, 32, 64, 32, 16
    # bf16 MXU operands with f32 accumulation -> tolerance loosened vs pure f32.
    TOL = dict(atol=5e-2, rtol=5e-2)

    # 1) fused small-graph path (adj VMEM-resident, single pallas_call).
    x, adj, w1, w2, w3 = _make_inputs(k_small, N, d1, d2, d3, hidden)
    ref = _reference(x, adj, w1, w2, w3)
    z_hat = igae_decoder(x, adj, w1, w2, w3)
    jax.block_until_ready(z_hat)
    assert z_hat.shape == (N, hidden)
    assert jnp.allclose(z_hat, ref, **TOL), float(jnp.max(jnp.abs(z_hat - ref)))

    # 2) tiled path: prepass + aggregation with a multi-block reduction
    #    (small tiles forced so the k-accumulator is exercised) and padding
    #    of a non-aligned N.
    N2 = 300
    x2, adj2, w1b, w2b, w3b = _make_inputs(k_mid, N2, d1, d2, d3, hidden)
    ref2 = _reference(x2, adj2, w1b, w2b, w3b)
    z2 = igae_decoder(x2, adj2, w1b, w2b, w3b,
                      _force_tiled=True, _tile_m=128, _tile_k=128)
    jax.block_until_ready(z2)
    assert z2.shape == (N2, hidden)
    assert jnp.allclose(z2, ref2, **TOL), float(jnp.max(jnp.abs(z2 - ref2)))

    # 3) tiled path with default tile selection and the blocked-s fallback.
    z3 = igae_decoder(x2, adj2, w1b, w2b, w3b,
                      _force_tiled=True, _s_resident=False)
    jax.block_until_ready(z3)
    assert jnp.allclose(z3, ref2, **TOL), float(jnp.max(jnp.abs(z3 - ref2)))

    print("KERNEL_OK")
</pallas_src>

<mosaic_0001>
module attributes {stable_mosaic.version = 11 : i64} {
  func.func @_fused_decoder_kernel(%arg0: memref<256x128xbf16, #tpu.memory_space<vmem>>, %arg1: memref<256x256xbf16, #tpu.memory_space<vmem>>, %arg2: memref<128x128xbf16, #tpu.memory_space<vmem>>, %arg3: memref<128x128xbf16, #tpu.memory_space<vmem>>, %arg4: memref<128x128xbf16, #tpu.memory_space<vmem>>, %arg5: memref<256x128xf32, #tpu.memory_space<vmem>>) attributes {dimension_semantics = [], scalar_prefetch = 0 : i64, scratch_operands = 0 : i64, tpu.core_type = #tpu.core_type<tc>} {
    %c0 = arith.constant 0 : index
    %c0_0 = arith.constant 0 : index
    %0 = vector.load %arg1[%c0, %c0_0] : memref<256x256xbf16, #tpu.memory_space<vmem>>, vector<256x256xbf16>
    %c0_1 = arith.constant 0 : index
    %c0_2 = arith.constant 0 : index
    %1 = vector.load %arg0[%c0_1, %c0_2] : memref<256x128xbf16, #tpu.memory_space<vmem>>, vector<256x128xbf16>
    %c0_3 = arith.constant 0 : index
    %c0_4 = arith.constant 0 : index
    %2 = vector.load %arg2[%c0_3, %c0_4] : memref<128x128xbf16, #tpu.memory_space<vmem>>, vector<128x128xbf16>
    %cst = arith.constant dense<0.000000e+00> : vector<256x128xf32>
    %3 = tpu.matmul %1, %2, %cst {dimension_numbers = #tpu.dot_dimension_numbers<[1], [0], [0], [1], [0, 0, 1, 1], [], []>} : vector<256x128xbf16>, vector<128x128xbf16>, vector<256x128xf32> -> vector<256x128xf32>
    %4 = math.tanh %3 : vector<256x128xf32>
    %5 = arith.truncf %4 : vector<256x128xf32> to vector<256x128xbf16>
    %cst_5 = arith.constant dense<0.000000e+00> : vector<256x128xf32>
    %6 = tpu.matmul %0, %5, %cst_5 {dimension_numbers = #tpu.dot_dimension_numbers<[1], [0], [0], [1], [0, 0, 1, 1], [], []>} : vector<256x256xbf16>, vector<256x128xbf16>, vector<256x128xf32> -> vector<256x128xf32>
    %7 = arith.truncf %6 : vector<256x128xf32> to vector<256x128xbf16>
    %c0_6 = arith.constant 0 : index
    %c0_7 = arith.constant 0 : index
    %8 = vector.load %arg3[%c0_6, %c0_7] : memref<128x128xbf16, #tpu.memory_space<vmem>>, vector<128x128xbf16>
    %cst_8 = arith.constant dense<0.000000e+00> : vector<256x128xf32>
    %9 = tpu.matmul %7, %8, %cst_8 {dimension_numbers = #tpu.dot_dimension_numbers<[1], [0], [0], [1], [0, 0, 1, 1], [], []>} : vector<256x128xbf16>, vector<128x128xbf16>, vector<256x128xf32> -> vector<256x128xf32>
    %10 = math.tanh %9 : vector<256x128xf32>
    %11 = arith.truncf %10 : vector<256x128xf32> to vector<256x128xbf16>
    %cst_9 = arith.constant dense<0.000000e+00> : vector<256x128xf32>
    %12 = tpu.matmul %0, %11, %cst_9 {dimension_numbers = #tpu.dot_dimension_numbers<[1], [0], [0], [1], [0, 0, 1, 1], [], []>} : vector<256x256xbf16>, vector<256x128xbf16>, vector<256x128xf32> -> vector<256x128xf32>
    %13 = arith.truncf %12 : vector<256x128xf32> to vector<256x128xbf16>
    %c0_10 = arith.constant 0 : index
    %c0_11 = arith.constant 0 : index
    %14 = vector.load %arg4[%c0_10, %c0_11] : memref<128x128xbf16, #tpu.memory_space<vmem>>, vector<128x128xbf16>
    %cst_12 = arith.constant dense<0.000000e+00> : vector<256x128xf32>
    %15 = tpu.matmul %13, %14, %cst_12 {dimension_numbers = #tpu.dot_dimension_numbers<[1], [0], [0], [1], [0, 0, 1, 1], [], []>} : vector<256x128xbf16>, vector<128x128xbf16>, vector<256x128xf32> -> vector<256x128xf32>
    %16 = arith.truncf %15 : vector<256x128xf32> to vector<256x128xbf16>
    %cst_13 = arith.constant dense<0.000000e+00> : vector<256x128xf32>
    %17 = tpu.matmul %0, %16, %cst_13 {dimension_numbers = #tpu.dot_dimension_numbers<[1], [0], [0], [1], [0, 0, 1, 1], [], []>} : vector<256x256xbf16>, vector<256x128xbf16>, vector<256x128xf32> -> vector<256x128xf32>
    %c0_14 = arith.constant 0 : index
    %c0_15 = arith.constant 0 : index
    %18 = vector.load %arg5[%c0_14, %c0_15] : memref<256x128xf32, #tpu.memory_space<vmem>>, vector<256x128xf32>
    tpu.vector_store %arg5[%c0_14, %c0_15], %17 {strides = array<i32>} : memref<256x128xf32, #tpu.memory_space<vmem>>, vector<256x128xf32>,
    return
  }
}

</mosaic_0001>

<llo_original>
// kernel: tpu_custom_call.1
$region0: #{tpu_custom_call.1}
  #allocation0 [shape = 'u32[]', space=smem, size = 0x4, offset = 0x4, fixed_abs, tag = 'smem constant byte address 0x4 - core index']
  #allocation1 [shape = 'u32[144,128]{1,0:T(1,128)}', space=vmem, size = 0x12000, scoped, tag = 'internal scratch']
  %s0 = inlined_call_operand.hbm [shape: bf16[256,128], index: 0, kind: input, shape index: {}]
  %s1 = inlined_call_operand.hbm [shape: bf16[256,256], index: 1, kind: input, shape index: {}]
  %s2 = inlined_call_operand.hbm [shape: bf16[128,128], index: 2, kind: input, shape index: {}]
  %s3 = inlined_call_operand.hbm [shape: bf16[128,128], index: 3, kind: input, shape index: {}]
  %s4 = inlined_call_operand.hbm [shape: bf16[128,128], index: 4, kind: input, shape index: {}]
  %s5 = inlined_call_operand.hbm [shape: f32[256,128], index: 5, kind: output, shape index: {}]
  %s6 = sld [smem:[#allocation0]]
  $region50: #{tpu_custom_call.1} parent=0
    _
  %s8 = ssub.s32 1, %s6
  %s9 = scalar_select 0, %s8, %s6
  $region1: #{tpu_custom_call.1} parent=0
    #allocation2 [shape = 'u8[65536]{0}', space=vmem, size = 0x10000, scoped, tag = 'input window, operand 0, single buffered']
    #allocation3 [shape = 's32[1]{0}', space=sflag, size = 0x4, scoped, tag = 'scoped memory for tpu_custom_call.1']
    #allocation4 [shape = 's32[1]{0}', space=sflag, size = 0x4, scoped, tag = 'scoped memory for tpu_custom_call.1']
    #allocation5 [shape = 'u8[131072]{0}', space=vmem, size = 0x20000, scoped, tag = 'input window, operand 1, single buffered']
    #allocation6 [shape = 's32[1]{0}', space=sflag, size = 0x4, scoped, tag = 'scoped memory for tpu_custom_call.1']
    #allocation7 [shape = 'u8[32768]{0}', space=vmem, size = 0x8000, scoped, tag = 'input window, operand 2, single buffered']
    #allocation8 [shape = 'u8[32768]{0}', space=vmem, size = 0x8000, scoped, tag = 'input window, operand 3, single buffered']
    #allocation9 [shape = 's32[1]{0}', space=sflag, size = 0x4, scoped, tag = 'scoped memory for tpu_custom_call.1']
    #allocation10 [shape = 'u8[32768]{0}', space=vmem, size = 0x8000, scoped, tag = 'input window, operand 4, single buffered']
    #allocation11 [shape = 'u8[131072]{0}', space=vmem, size = 0x20000, scoped, tag = 'output window, operand 0, single buffered']
    %10 = vsyncpa [#allocation3], 0
    %11 = vsyncpa [#allocation6], 0
    %12 = vsyncpa [#allocation9], 0
    %13 = vsyncpa [#allocation4], 0
    // Predicated region
    $region2: #{tpu_custom_call.1} parent=1 // pred_check
      _
    $region3: #{tpu_custom_call.1} parent=1 // pred_check_branch
      %15 = sbr.rel (0) target = $region5
    $region4: #{tpu_custom_call.1} parent=1 // pred_region
      %s17 = ssub.s32 2048, 2048
      %18 = vsyncadd [#allocation3], %s17
      %s19 = sshll.u32 [#allocation2], 4
      %s20 = int_to_ptr.vmem [resolvable:$true] %s19
      %25 = dma.hbm_to_vmem [thread:$0]  %s0, 2048, %s20, [#allocation3], 64, 64, 4
    $region5: #{tpu_custom_call.1} parent=1 // pred_fallthru
      _
    // Predicated region
    $region6: #{tpu_custom_call.1} parent=1 // pred_check
      _
    $region7: #{tpu_custom_call.1} parent=1 // pred_check_branch
      %27 = sbr.rel (0) target = $region9
    $region8: #{tpu_custom_call.1} parent=1 // pred_region
      %s29 = ssub.s32 4096, 4096
      %30 = vsyncadd [#allocation6], %s29
      %s31 = sshll.u32 [#allocation5], 4
      %s32 = int_to_ptr.vmem [resolvable:$true] %s31
      %37 = dma.hbm_to_vmem [thread:$0]  %s1, 4096, %s32, [#allocation6], 128, 128, 8
    $region9: #{tpu_custom_call.1} parent=1 // pred_fallthru
      _
    // Predicated region
    $region10: #{tpu_custom_call.1} parent=1 // pred_check
      _
    $region11: #{tpu_custom_call.1} parent=1 // pred_check_branch
      %39 = sbr.rel (0) target = $region13
    $region12: #{tpu_custom_call.1} parent=1 // pred_region
      %s41 = ssub.s32 1024, 1024
      %42 = vsyncadd [#allocation6], %s41
      %s43 = sshll.u32 [#allocation7], 4
      %s44 = int_to_ptr.vmem [resolvable:$true] %s43
      %49 = dma.hbm_to_vmem [thread:$0]  %s2, 1024, %s44, [#allocation6], 64, 64, 4
    $region13: #{tpu_custom_call.1} parent=1 // pred_fallthru
      _
    // Predicated region
    $region14: #{tpu_custom_call.1} parent=1 // pred_check
      _
    $region15: #{tpu_custom_call.1} parent=1 // pred_check_branch
      %51 = sbr.rel (0) target = $region17
    $region16: #{tpu_custom_call.1} parent=1 // pred_region
      %s53 = ssub.s32 1024, 1024
      %54 = vsyncadd [#allocation9], %s53
      %s55 = sshll.u32 [#allocation8], 4
      %s56 = int_to_ptr.vmem [resolvable:$true] %s55
      %61 = dma.hbm_to_vmem [thread:$0]  %s3, 1024, %s56, [#allocation9], 64, 64, 4
    $region17: #{tpu_custom_call.1} parent=1 // pred_fallthru
      _
    // Predicated region
    $region18: #{tpu_custom_call.1} parent=1 // pred_check
      _
    $region19: #{tpu_custom_call.1} parent=1 // pred_check_branch
      %63 = sbr.rel (0) target = $region21
    $region20: #{tpu_custom_call.1} parent=1 // pred_region
      %s65 = ssub.s32 1024, 1024
      %66 = vsyncadd [#allocation9], %s65
      %s67 = sshll.u32 [#allocation10], 4
      %s68 = int_to_ptr.vmem [resolvable:$true] %s67
      %73 = dma.hbm_to_vmem [thread:$0]  %s4, 1024, %s68, [#allocation9], 64, 64, 4
    $region21: #{tpu_custom_call.1} parent=1 // pred_fallthru
      _
    // Predicated region
    $region22: #{tpu_custom_call.1} parent=1 // pred_check
      _
    $region23: #{tpu_custom_call.1} parent=1 // pred_check_branch
      %75 = sbr.rel (0) target = $region25
    $region24: #{tpu_custom_call.1} parent=1 // pred_region
      %76 = dma.done [#allocation3], 2048
    $region25: #{tpu_custom_call.1} parent=1 // pred_fallthru
      _
    // Predicated region
    $region26: #{tpu_custom_call.1} parent=1 // pred_check
      _
    $region27: #{tpu_custom_call.1} parent=1 // pred_check_branch
      %78 = sbr.rel (0) target = $region29
    $region28: #{tpu_custom_call.1} parent=1 // pred_region
      %79 = dma.done [#allocation6], 4096
    $region29: #{tpu_custom_call.1} parent=1 // pred_fallthru
      _
    // Predicated region
    $region30: #{tpu_custom_call.1} parent=1 // pred_check
      _
    $region31: #{tpu_custom_call.1} parent=1 // pred_check_branch
      %81 = sbr.rel (0) target = $region33
    $region32: #{tpu_custom_call.1} parent=1 // pred_region
      %82 = dma.done [#allocation6], 1024
    $region33: #{tpu_custom_call.1} parent=1 // pred_fallthru
      _
    // Predicated region
    $region34: #{tpu_custom_call.1} parent=1 // pred_check
      _
    $region35: #{tpu_custom_call.1} parent=1 // pred_check_branch
      %84 = sbr.rel (0) target = $region37
    $region36: #{tpu_custom_call.1} parent=1 // pred_region
      %85 = dma.done [#allocation9], 1024
    $region37: #{tpu_custom_call.1} parent=1 // pred_fallthru
      _
    // Predicated region
    $region38: #{tpu_custom_call.1} parent=1 // pred_check
      _
    $region39: #{tpu_custom_call.1} parent=1 // pred_check_branch
      %87 = sbr.rel (0) target = $region41
    $region40: #{tpu_custom_call.1} parent=1 // pred_region
      %88 = dma.done [#allocation9], 1024
    $region41: #{tpu_custom_call.1} parent=1 // pred_fallthru
      _
    %v90 = vld [vmem:[#allocation5] sm:$0xff]
    %v91 = vld [vmem:[#allocation5 + $0x8] sm:$0xff]
    %v92 = vld [vmem:[#allocation5 + $0x10] sm:$0xff]
    %v93 = vld [vmem:[#allocation5 + $0x18] sm:$0xff]
    %v94 = vld [vmem:[#allocation5 + $0x20] sm:$0xff]
    %v95 = vld [vmem:[#allocation5 + $0x28] sm:$0xff]
    %v96 = vld [vmem:[#allocation5 + $0x30] sm:$0xff]
    %v97 = vld [vmem:[#allocation5 + $0x38] sm:$0xff]
    %v98 = vld [vmem:[#allocation5 + $0x40] sm:$0xff]
    %v99 = vld [vmem:[#allocation5 + $0x48] sm:$0xff]
    %v100 = vld [vmem:[#allocation5 + $0x50] sm:$0xff]
    %v101 = vld [vmem:[#allocation5 + $0x58] sm:$0xff]
    %v102 = vld [vmem:[#allocation5 + $0x60] sm:$0xff]
    %v103 = vld [vmem:[#allocation5 + $0x68] sm:$0xff]
    %v104 = vld [vmem:[#allocation5 + $0x70] sm:$0xff]
    %v105 = vld [vmem:[#allocation5 + $0x78] sm:$0xff]
    %v106 = vld [vmem:[#allocation5 + $0x80] sm:$0xff]
    %v107 = vld [vmem:[#allocation5 + $0x88] sm:$0xff]
    %v108 = vld [vmem:[#allocation5 + $0x90] sm:$0xff]
    %v109 = vld [vmem:[#allocation5 + $0x98] sm:$0xff]
    %v110 = vld [vmem:[#allocation5 + $0xa0] sm:$0xff]
    %v111 = vld [vmem:[#allocation5 + $0xa8] sm:$0xff]
    %v112 = vld [vmem:[#allocation5 + $0xb0] sm:$0xff]
    %v113 = vld [vmem:[#allocation5 + $0xb8] sm:$0xff]
    %v114 = vld [vmem:[#allocation5 + $0xc0] sm:$0xff]
    %v115 = vld [vmem:[#allocation5 + $0xc8] sm:$0xff]
    %v116 = vld [vmem:[#allocation5 + $0xd0] sm:$0xff]
    %v117 = vld [vmem:[#allocation5 + $0xd8] sm:$0xff]
    %v118 = vld [vmem:[#allocation5 + $0xe0] sm:$0xff]
    %v119 = vld [vmem:[#allocation5 + $0xe8] sm:$0xff]
    %v120 = vld [vmem:[#allocation5 + $0xf0] sm:$0xff]
    %v121 = vld [vmem:[#allocation5 + $0xf8] sm:$0xff]
    %v122 = vld [vmem:[#allocation2] sm:$0xf]
    %v123 = vld [vmem:[#allocation2 + $0x4] sm:$0xf]
    %v124 = vld [vmem:[#allocation2 + $0x8] sm:$0xf]
    %v125 = vld [vmem:[#allocation2 + $0xc] sm:$0xf]
    %v126 = vld [vmem:[#allocation2 + $0x10] sm:$0xf]
    %v127 = vld [vmem:[#allocation2 + $0x14] sm:$0xf]
    %v128 = vld [vmem:[#allocation2 + $0x18] sm:$0xf]
    %v129 = vld [vmem:[#allocation2 + $0x1c] sm:$0xf]
    %v130 = vld [vmem:[#allocation2 + $0x20] sm:$0xf]
    %v131 = vld [vmem:[#allocation2 + $0x24] sm:$0xf]
    %v132 = vld [vmem:[#allocation2 + $0x28] sm:$0xf]
    %v133 = vld [vmem:[#allocation2 + $0x2c] sm:$0xf]
    %v134 = vld [vmem:[#allocation2 + $0x30] sm:$0xf]
    %v135 = vld [vmem:[#allocation2 + $0x34] sm:$0xf]
    %v136 = vld [vmem:[#allocation2 + $0x38] sm:$0xf]
    %v137 = vld [vmem:[#allocation2 + $0x3c] sm:$0xf]
    %v138 = vld [vmem:[#allocation2 + $0x40] sm:$0xf]
    %v139 = vld [vmem:[#allocation2 + $0x44] sm:$0xf]
    %v140 = vld [vmem:[#allocation2 + $0x48] sm:$0xf]
    %v141 = vld [vmem:[#allocation2 + $0x4c] sm:$0xf]
    %v142 = vld [vmem:[#allocation2 + $0x50] sm:$0xf]
    %v143 = vld [vmem:[#allocation2 + $0x54] sm:$0xf]
    %v144 = vld [vmem:[#allocation2 + $0x58] sm:$0xf]
    %v145 = vld [vmem:[#allocation2 + $0x5c] sm:$0xf]
    %v146 = vld [vmem:[#allocation2 + $0x60] sm:$0xf]
    %v147 = vld [vmem:[#allocation2 + $0x64] sm:$0xf]
    %v148 = vld [vmem:[#allocation2 + $0x68] sm:$0xf]
    %v149 = vld [vmem:[#allocation2 + $0x6c] sm:$0xf]
    %v150 = vld [vmem:[#allocation2 + $0x70] sm:$0xf]
    %v151 = vld [vmem:[#allocation2 + $0x74] sm:$0xf]
    %v152 = vld [vmem:[#allocation2 + $0x78] sm:$0xf]
    %v153 = vld [vmem:[#allocation2 + $0x7c] sm:$0xf]
    %v154 = vld [vmem:[#allocation7] sm:$0xf]
    %v155 = vld [vmem:[#allocation7 + $0x4] sm:$0xf]
    %v156 = vld [vmem:[#allocation7 + $0x8] sm:$0xf]
    %v157 = vld [vmem:[#allocation7 + $0xc] sm:$0xf]
    %v158 = vld [vmem:[#allocation7 + $0x10] sm:$0xf]
    %v159 = vld [vmem:[#allocation7 + $0x14] sm:$0xf]
    %v160 = vld [vmem:[#allocation7 + $0x18] sm:$0xf]
    %v161 = vld [vmem:[#allocation7 + $0x1c] sm:$0xf]
    %v162 = vld [vmem:[#allocation7 + $0x20] sm:$0xf]
    %v163 = vld [vmem:[#allocation7 + $0x24] sm:$0xf]
    %v164 = vld [vmem:[#allocation7 + $0x28] sm:$0xf]
    %v165 = vld [vmem:[#allocation7 + $0x2c] sm:$0xf]
    %v166 = vld [vmem:[#allocation7 + $0x30] sm:$0xf]
    %v167 = vld [vmem:[#allocation7 + $0x34] sm:$0xf]
    %v168 = vld [vmem:[#allocation7 + $0x38] sm:$0xf]
    %v169 = vld [vmem:[#allocation7 + $0x3c] sm:$0xf]
    %v202 = vunpack.c.l.b16 %v122
    %v203 = vunpack.c.l.b16 %v123
    %v204 = vunpack.c.l.b16 %v124
    %v205 = vunpack.c.l.b16 %v125
    %v206 = vunpack.c.l.b16 %v126
    %v207 = vunpack.c.l.b16 %v127
    %v208 = vunpack.c.l.b16 %v128
    %v209 = vunpack.c.l.b16 %v129
    %v210 = vunpack.c.l.b16 %v130
    %v211 = vunpack.c.l.b16 %v131
    %v212 = vunpack.c.l.b16 %v132
    %v213 = vunpack.c.l.b16 %v133
    %v214 = vunpack.c.l.b16 %v134
    %v215 = vunpack.c.l.b16 %v135
    %v216 = vunpack.c.l.b16 %v136
    %v217 = vunpack.c.l.b16 %v137
    %v218 = vunpack.c.l.b16 %v138
    %v219 = vunpack.c.l.b16 %v139
    %v220 = vunpack.c.l.b16 %v140
    %v221 = vunpack.c.l.b16 %v141
    %v222 = vunpack.c.l.b16 %v142
    %v223 = vunpack.c.l.b16 %v143
    %v224 = vunpack.c.l.b16 %v144
    %v225 = vunpack.c.l.b16 %v145
    %v226 = vunpack.c.l.b16 %v146
    %v227 = vunpack.c.l.b16 %v147
    %v228 = vunpack.c.l.b16 %v148
    %v229 = vunpack.c.l.b16 %v149
    %v230 = vunpack.c.l.b16 %v150
    %v231 = vunpack.c.l.b16 %v151
    %v232 = vunpack.c.l.b16 %v152
    %v233 = vunpack.c.l.b16 %v153
    %v234 = vpack.c.b16 %v203, %v202
    %v235 = vpack.c.b16 %v205, %v204
    %v236 = vpack.c.b16 %v207, %v206
    %v237 = vpack.c.b16 %v209, %v208
    %v238 = vpack.c.b16 %v211, %v210
    %v239 = vpack.c.b16 %v213, %v212
    %v240 = vpack.c.b16 %v215, %v214
    %v241 = vpack.c.b16 %v217, %v216
    %v242 = vpack.c.b16 %v219, %v218
    %v243 = vpack.c.b16 %v221, %v220
    %v244 = vpack.c.b16 %v223, %v222
    %v245 = vpack.c.b16 %v225, %v224
    %v246 = vpack.c.b16 %v227, %v226
    %v247 = vpack.c.b16 %v229, %v228
    %v248 = vpack.c.b16 %v231, %v230
    %v249 = vpack.c.b16 %v233, %v232
    %v282 = vunpack.c.l.b16 %v154
    %v283 = vunpack.c.l.b16 %v155
    %v284 = vunpack.c.l.b16 %v156
    %v285 = vunpack.c.l.b16 %v157
    %v286 = vunpack.c.l.b16 %v158
    %v287 = vunpack.c.l.b16 %v159
    %v288 = vunpack.c.l.b16 %v160
    %v289 = vunpack.c.l.b16 %v161
    %v290 = vunpack.c.l.b16 %v162
    %v291 = vunpack.c.l.b16 %v163
    %v292 = vunpack.c.l.b16 %v164
    %v293 = vunpack.c.l.b16 %v165
    %v294 = vunpack.c.l.b16 %v166
    %v295 = vunpack.c.l.b16 %v167
    %v296 = vunpack.c.l.b16 %v168
    %v297 = vunpack.c.l.b16 %v169
    %v298 = vpack.c.b16 %v283, %v282
    %v299 = vpack.c.b16 %v285, %v284
    %v300 = vpack.c.b16 %v287, %v286
    %v301 = vpack.c.b16 %v289, %v288
    %v302 = vpack.c.b16 %v291, %v290
    %v303 = vpack.c.b16 %v293, %v292
    %v304 = vpack.c.b16 %v295, %v294
    %v305 = vpack.c.b16 %v297, %v296
    %314 = vmatprep.subr.bf16.mxu0 0
    %315 = vmatpush1.bf16.msra.mxu0 %v305
    %316 = vmatprep.subr.bf16.mxu0 0
    %317 = vmatpush1.bf16.msra.mxu0 %v304
    %318 = vmatprep.subr.bf16.mxu0 0
    %319 = vmatpush1.bf16.msra.mxu0 %v303
    %320 = vmatprep.subr.bf16.mxu0 0
    %321 = vmatpush1.bf16.msra.mxu0 %v302
    %322 = vmatprep.subr.bf16.mxu0 0
    %323 = vmatpush1.bf16.msra.mxu0 %v301
    %324 = vmatprep.subr.bf16.mxu0 0
    %325 = vmatpush1.bf16.msra.mxu0 %v300
    %326 = vmatprep.subr.bf16.mxu0 0
    %327 = vmatpush1.bf16.msra.mxu0 %v299
    %328 = vmatprep.subr.bf16.mxu0 0
    %329 = vmatpush1.bf16.msra.mxu0 %v298
    %330 = vmatprep.subr.bf16.mxu0 0
    %331 = vmatpush2.bf16.msra.mxu0 0
    %332 = vmatprep.subr.bf16.mxu0 0
    %333 = vmatpush2.bf16.msra.mxu0 0
    %334 = vmatprep.subr.bf16.mxu0 0
    %335 = vmatpush2.bf16.msra.mxu0 0
    %336 = vmatprep.subr.bf16.mxu0 0
    %337 = vmatpush2.bf16.msra.mxu0 0
    %338 = vmatprep.subr.bf16.mxu0 0
    %339 = vmatpush2.bf16.msra.mxu0 0
    %340 = vmatprep.subr.bf16.mxu0 0
    %341 = vmatpush2.bf16.msra.mxu0 0
    %342 = vmatprep.subr.bf16.mxu0 0
    %343 = vmatpush2.bf16.msra.mxu0 0
    %344 = vmatprep.subr.bf16.mxu0 0
    %345 = vmatpush2.bf16.msra.mxu0 0
    %346 = vmatprep.mubr.bf16.mxu0 0
    %347 = vmatmul.mubr.bf16.gmra.mxu0 %v234
    %v348 = vpop.f32.mrf.mxu0
    %v349 = vadd.f32 0.0, %v348
    %v350 = vpop.f32.mrf.mxu0
    %v351 = vpop.f32.mrf.mxu0
    %v352 = vadd.f32 0.0, %v351
    %v353 = vpop.f32.mrf.mxu0
    %354 = vmatprep.mubr.bf16.mxu0 0
    %355 = vmatmul.mubr.bf16.gmra.mxu0 %v235
    %v356 = vpop.f32.mrf.mxu0
    %v357 = vadd.f32 0.0, %v356
    %v358 = vpop.f32.mrf.mxu0
    %v359 = vpop.f32.mrf.mxu0
    %v360 = vadd.f32 0.0, %v359
    %v361 = vpop.f32.mrf.mxu0
    %362 = vmatprep.mubr.bf16.mxu0 0
    %363 = vmatmul.mubr.bf16.gmra.mxu0 %v236
    %v364 = vpop.f32.mrf.mxu0
    %v365 = vadd.f32 0.0, %v364
    %v366 = vpop.f32.mrf.mxu0
    %v367 = vpop.f32.mrf.mxu0
    %v368 = vadd.f32 0.0, %v367
    %v369 = vpop.f32.mrf.mxu0
    %370 = vmatprep.mubr.bf16.mxu0 0
    %371 = vmatmul.mubr.bf16.gmra.mxu0 %v237
    %v372 = vpop.f32.mrf.mxu0
    %v373 = vadd.f32 0.0, %v372
    %v374 = vpop.f32.mrf.mxu0
    %v375 = vpop.f32.mrf.mxu0
    %v376 = vadd.f32 0.0, %v375
    %v377 = vpop.f32.mrf.mxu0
    %378 = vmatprep.mubr.bf16.mxu0 0
    %379 = vmatmul.mubr.bf16.gmra.mxu0 %v238
    %v380 = vpop.f32.mrf.mxu0
    %v381 = vadd.f32 0.0, %v380
    %v382 = vpop.f32.mrf.mxu0
    %v383 = vpop.f32.mrf.mxu0
    %v384 = vadd.f32 0.0, %v383
    %v385 = vpop.f32.mrf.mxu0
    %386 = vmatprep.mubr.bf16.mxu0 0
    %387 = vmatmul.mubr.bf16.gmra.mxu0 %v239
    %v388 = vpop.f32.mrf.mxu0
    %v389 = vadd.f32 0.0, %v388
    %v390 = vpop.f32.mrf.mxu0
    %v391 = vpop.f32.mrf.mxu0
    %v392 = vadd.f32 0.0, %v391
    %v393 = vpop.f32.mrf.mxu0
    %394 = vmatprep.mubr.bf16.mxu0 0
    %395 = vmatmul.mubr.bf16.gmra.mxu0 %v240
    %v396 = vpop.f32.mrf.mxu0
    %v397 = vadd.f32 0.0, %v396
    %v398 = vpop.f32.mrf.mxu0
    %v399 = vpop.f32.mrf.mxu0
    %v400 = vadd.f32 0.0, %v399
    %v401 = vpop.f32.mrf.mxu0
    %402 = vmatprep.mubr.bf16.mxu0 0
    %403 = vmatmul.mubr.bf16.gmra.mxu0 %v241
    %v404 = vpop.f32.mrf.mxu0
    %v405 = vadd.f32 0.0, %v404
    %v406 = vpop.f32.mrf.mxu0
    %v407 = vpop.f32.mrf.mxu0
    %v408 = vadd.f32 0.0, %v407
    %v409 = vpop.f32.mrf.mxu0
    %410 = vmatprep.mubr.bf16.mxu0 0
    %411 = vmatmul.mubr.bf16.gmra.mxu0 %v242
    %v412 = vpop.f32.mrf.mxu0
    %v413 = vadd.f32 0.0, %v412
    %v414 = vpop.f32.mrf.mxu0
    %v415 = vpop.f32.mrf.mxu0
    %v416 = vadd.f32 0.0, %v415
    %v417 = vpop.f32.mrf.mxu0
    %418 = vmatprep.mubr.bf16.mxu0 0
    %419 = vmatmul.mubr.bf16.gmra.mxu0 %v243
    %v420 = vpop.f32.mrf.mxu0
    %v421 = vadd.f32 0.0, %v420
    %v422 = vpop.f32.mrf.mxu0
    %v423 = vpop.f32.mrf.mxu0
    %v424 = vadd.f32 0.0, %v423
    %v425 = vpop.f32.mrf.mxu0
    %426 = vmatprep.mubr.bf16.mxu0 0
    %427 = vmatmul.mubr.bf16.gmra.mxu0 %v244
    %v428 = vpop.f32.mrf.mxu0
    %v429 = vadd.f32 0.0, %v428
    %v430 = vpop.f32.mrf.mxu0
    %v431 = vpop.f32.mrf.mxu0
    %v432 = vadd.f32 0.0, %v431
    %v433 = vpop.f32.mrf.mxu0
    %434 = vmatprep.mubr.bf16.mxu0 0
    %435 = vmatmul.mubr.bf16.gmra.mxu0 %v245
    %v436 = vpop.f32.mrf.mxu0
    %v437 = vadd.f32 0.0, %v436
    %v438 = vpop.f32.mrf.mxu0
    %v439 = vpop.f32.mrf.mxu0
    %v440 = vadd.f32 0.0, %v439
    %v441 = vpop.f32.mrf.mxu0
    %442 = vmatprep.mubr.bf16.mxu0 0
    %443 = vmatmul.mubr.bf16.gmra.mxu0 %v246
    %v444 = vpop.f32.mrf.mxu0
    %v445 = vadd.f32 0.0, %v444
    %v446 = vpop.f32.mrf.mxu0
    %v447 = vpop.f32.mrf.mxu0
    %v448 = vadd.f32 0.0, %v447
    %v449 = vpop.f32.mrf.mxu0
    %450 = vmatprep.mubr.bf16.mxu0 0
    %451 = vmatmul.mubr.bf16.gmra.mxu0 %v247
    %v452 = vpop.f32.mrf.mxu0
    %v453 = vadd.f32 0.0, %v452
    %v454 = vpop.f32.mrf.mxu0
    %v455 = vpop.f32.mrf.mxu0
    %v456 = vadd.f32 0.0, %v455
    %v457 = vpop.f32.mrf.mxu0
    %458 = vmatprep.mubr.bf16.mxu0 0
    %459 = vmatmul.mubr.bf16.gmra.mxu0 %v248
    %v460 = vpop.f32.mrf.mxu0
    %v461 = vadd.f32 0.0, %v460
    %v462 = vpop.f32.mrf.mxu0
    %v463 = vpop.f32.mrf.mxu0
    %v464 = vadd.f32 0.0, %v463
    %v465 = vpop.f32.mrf.mxu0
    %466 = vmatprep.mubr.bf16.mxu0 0
    %467 = vmatmul.mubr.bf16.gmra.mxu0 %v249
    %v468 = vpop.f32.mrf.mxu0
    %v469 = vadd.f32 0.0, %v468
    %v470 = vpop.f32.mrf.mxu0
    %v471 = vpop.f32.mrf.mxu0
    %v472 = vadd.f32 0.0, %v471
    %v473 = vpop.f32.mrf.mxu0
    %474 = vdwg.mxu0
    %v475 = vtanh.pop %v349
    %v476 = vtanh.pop %v352
    %v477 = vtanh.pop %v357
    %v478 = vtanh.pop %v360
    %v479 = vtanh.pop %v365
    %v480 = vtanh.pop %v368
    %v481 = vtanh.pop %v373
    %v482 = vtanh.pop %v376
    %v483 = vtanh.pop %v381
    %v484 = vtanh.pop %v384
    %v485 = vtanh.pop %v389
    %v486 = vtanh.pop %v392
    %v487 = vtanh.pop %v397
    %v488 = vtanh.pop %v400
    %v489 = vtanh.pop %v405
    %v490 = vtanh.pop %v408
    %v491 = vtanh.pop %v413
    %v492 = vtanh.pop %v416
    %v493 = vtanh.pop %v421
    %v494 = vtanh.pop %v424
    %v495 = vtanh.pop %v429
    %v496 = vtanh.pop %v432
    %v497 = vtanh.pop %v437
    %v498 = vtanh.pop %v440
    %v499 = vtanh.pop %v445
    %v500 = vtanh.pop %v448
    %v501 = vtanh.pop %v453
    %v502 = vtanh.pop %v456
    %v503 = vtanh.pop %v461
    %v504 = vtanh.pop %v464
    %v505 = vtanh.pop %v469
    %v506 = vtanh.pop %v472
    %v507 = vpack.c.bf16 %v476, %v475
    %v508 = vpack.c.bf16 %v478, %v477
    %v509 = vpack.c.bf16 %v480, %v479
    %v510 = vpack.c.bf16 %v482, %v481
    %v511 = vpack.c.bf16 %v484, %v483
    %v512 = vpack.c.bf16 %v486, %v485
    %v513 = vpack.c.bf16 %v488, %v487
    %v514 = vpack.c.bf16 %v490, %v489
    %v515 = vpack.c.bf16 %v492, %v491
    %v516 = vpack.c.bf16 %v494, %v493
    %v517 = vpack.c.bf16 %v496, %v495
    %v518 = vpack.c.bf16 %v498, %v497
    %v519 = vpack.c.bf16 %v500, %v499
    %v520 = vpack.c.bf16 %v502, %v501
    %v521 = vpack.c.bf16 %v504, %v503
    %v522 = vpack.c.bf16 %v506, %v505
    %v555 = vunpack.c.l.b16 %v90
    %v556 = vunpack.c.h.b16 %v90
    %v557 = vunpack.c.l.b16 %v91
    %v558 = vunpack.c.h.b16 %v91
    %v559 = vunpack.c.l.b16 %v92
    %v560 = vunpack.c.h.b16 %v92
    %v561 = vunpack.c.l.b16 %v93
    %v562 = vunpack.c.h.b16 %v93
    %v563 = vunpack.c.l.b16 %v94
    %v564 = vunpack.c.h.b16 %v94
    %v565 = vunpack.c.l.b16 %v95
    %v566 = vunpack.c.h.b16 %v95
    %v567 = vunpack.c.l.b16 %v96
    %v568 = vunpack.c.h.b16 %v96
    %v569 = vunpack.c.l.b16 %v97
    %v570 = vunpack.c.h.b16 %v97
    %v571 = vunpack.c.l.b16 %v98
    %v572 = vunpack.c.h.b16 %v98
    %v573 = vunpack.c.l.b16 %v99
    %v574 = vunpack.c.h.b16 %v99
    %v575 = vunpack.c.l.b16 %v100
    %v576 = vunpack.c.h.b16 %v100
    %v577 = vunpack.c.l.b16 %v101
    %v578 = vunpack.c.h.b16 %v101
    %v579 = vunpack.c.l.b16 %v102
    %v580 = vunpack.c.h.b16 %v102
    %v581 = vunpack.c.l.b16 %v103
    %v582 = vunpack.c.h.b16 %v103
    %v583 = vunpack.c.l.b16 %v104
    %v584 = vunpack.c.h.b16 %v104
    %v585 = vunpack.c.l.b16 %v105
    %v586 = vunpack.c.h.b16 %v105
    %v587 = vunpack.c.l.b16 %v106
    %v588 = vunpack.c.h.b16 %v106
    %v589 = vunpack.c.l.b16 %v107
    %v590 = vunpack.c.h.b16 %v107
    %v591 = vunpack.c.l.b16 %v108
    %v592 = vunpack.c.h.b16 %v108
    %v593 = vunpack.c.l.b16 %v109
    %v594 = vunpack.c.h.b16 %v109
    %v595 = vunpack.c.l.b16 %v110
    %v596 = vunpack.c.h.b16 %v110
    %v597 = vunpack.c.l.b16 %v111
    %v598 = vunpack.c.h.b16 %v111
    %v599 = vunpack.c.l.b16 %v112
    %v600 = vunpack.c.h.b16 %v112
    %v601 = vunpack.c.l.b16 %v113
    %v602 = vunpack.c.h.b16 %v113
    %v603 = vunpack.c.l.b16 %v114
    %v604 = vunpack.c.h.b16 %v114
    %v605 = vunpack.c.l.b16 %v115
    %v606 = vunpack.c.h.b16 %v115
    %v607 = vunpack.c.l.b16 %v116
    %v608 = vunpack.c.h.b16 %v116
    %v609 = vunpack.c.l.b16 %v117
    %v610 = vunpack.c.h.b16 %v117
    %v611 = vunpack.c.l.b16 %v118
    %v612 = vunpack.c.h.b16 %v118
    %v613 = vunpack.c.l.b16 %v119
    %v614 = vunpack.c.h.b16 %v119
    %v615 = vunpack.c.l.b16 %v120
    %v616 = vunpack.c.h.b16 %v120
    %v617 = vunpack.c.l.b16 %v121
    %v618 = vunpack.c.h.b16 %v121
    %v619 = vpack.c.b16 %v557, %v555
    %v620 = vpack.c.b16 %v558, %v556
    %v621 = vpack.c.b16 %v561, %v559
    %v622 = vpack.c.b16 %v562, %v560
    %v623 = vpack.c.b16 %v565, %v563
    %v624 = vpack.c.b16 %v566, %v564
    %v625 = vpack.c.b16 %v569, %v567
    %v626 = vpack.c.b16 %v570, %v568
    %v627 = vpack.c.b16 %v573, %v571
    %v628 = vpack.c.b16 %v574, %v572
    %v629 = vpack.c.b16 %v577, %v575
    %v630 = vpack.c.b16 %v578, %v576
    %v631 = vpack.c.b16 %v581, %v579
    %v632 = vpack.c.b16 %v582, %v580
    %v633 = vpack.c.b16 %v585, %v583
    %v634 = vpack.c.b16 %v586, %v584
    %v635 = vpack.c.b16 %v589, %v587
    %v636 = vpack.c.b16 %v590, %v588
    %v637 = vpack.c.b16 %v593, %v591
    %v638 = vpack.c.b16 %v594, %v592
    %v639 = vpack.c.b16 %v597, %v595
    %v640 = vpack.c.b16 %v598, %v596
    %v641 = vpack.c.b16 %v601, %v599
    %v642 = vpack.c.b16 %v602, %v600
    %v643 = vpack.c.b16 %v605, %v603
    %v644 = vpack.c.b16 %v606, %v604
    %v645 = vpack.c.b16 %v609, %v607
    %v646 = vpack.c.b16 %v610, %v608
    %v647 = vpack.c.b16 %v613, %v611
    %v648 = vpack.c.b16 %v614, %v612
    %v649 = vpack.c.b16 %v617, %v615
    %v650 = vpack.c.b16 %v618, %v616
    %683 = vmatprep.subr.bf16.mxu0 0
    %684 = vmatpush1.bf16.msra.mxu0 %v514
    %685 = vmatprep.subr.bf16.mxu0 0
    %686 = vmatpush1.bf16.msra.mxu0 %v513
    %687 = vmatprep.subr.bf16.mxu0 0
    %688 = vmatpush1.bf16.msra.mxu0 %v512
    %689 = vmatprep.subr.bf16.mxu0 0
    %690 = vmatpush1.bf16.msra.mxu0 %v511
    %691 = vmatprep.subr.bf16.mxu0 0
    %692 = vmatpush1.bf16.msra.mxu0 %v510
    %693 = vmatprep.subr.bf16.mxu0 0
    %694 = vmatpush1.bf16.msra.mxu0 %v509
    %695 = vmatprep.subr.bf16.mxu0 0
    %696 = vmatpush1.bf16.msra.mxu0 %v508
    %697 = vmatprep.subr.bf16.mxu0 0
    %698 = vmatpush1.bf16.msra.mxu0 %v507
    %699 = vmatprep.subr.bf16.mxu0 0
    %700 = vmatpush2.bf16.msra.mxu0 %v522
    %701 = vmatprep.subr.bf16.mxu0 0
    %702 = vmatpush2.bf16.msra.mxu0 %v521
    %703 = vmatprep.subr.bf16.mxu0 0
    %704 = vmatpush2.bf16.msra.mxu0 %v520
    %705 = vmatprep.subr.bf16.mxu0 0
    %706 = vmatpush2.bf16.msra.mxu0 %v519
    %707 = vmatprep.subr.bf16.mxu0 0
    %708 = vmatpush2.bf16.msra.mxu0 %v518
    %709 = vmatprep.subr.bf16.mxu0 0
    %710 = vmatpush2.bf16.msra.mxu0 %v517
    %711 = vmatprep.subr.bf16.mxu0 0
    %712 = vmatpush2.bf16.msra.mxu0 %v516
    %713 = vmatprep.subr.bf16.mxu0 0
    %714 = vmatpush2.bf16.msra.mxu0 %v515
    %715 = vmatprep.mubr.bf16.mxu0 %v620
    %716 = vmatmul.mubr.bf16.gmra.mxu0 %v619
    %v717 = vpop.f32.mrf.mxu0
    %v718 = vadd.f32 0.0, %v717
    %v719 = vpop.f32.mrf.mxu0
    %v720 = vpop.f32.mrf.mxu0
    %v721 = vadd.f32 0.0, %v720
    %v722 = vpop.f32.mrf.mxu0
    %723 = vmatprep.mubr.bf16.mxu0 %v622
    %724 = vmatmul.mubr.bf16.gmra.mxu0 %v621
    %v725 = vpop.f32.mrf.mxu0
    %v726 = vadd.f32 0.0, %v725
    %v727 = vpop.f32.mrf.mxu0
    %v728 = vpop.f32.mrf.mxu0
    %v729 = vadd.f32 0.0, %v728
    %v730 = vpop.f32.mrf.mxu0
    %731 = vmatprep.mubr.bf16.mxu0 %v624
    %732 = vmatmul.mubr.bf16.gmra.mxu0 %v623
    %v733 = vpop.f32.mrf.mxu0
    %v734 = vadd.f32 0.0, %v733
    %v735 = vpop.f32.mrf.mxu0
    %v736 = vpop.f32.mrf.mxu0
    %v737 = vadd.f32 0.0, %v736
    %v738 = vpop.f32.mrf.mxu0
    %739 = vmatprep.mubr.bf16.mxu0 %v626
    %740 = vmatmul.mubr.bf16.gmra.mxu0 %v625
    %v741 = vpop.f32.mrf.mxu0
    %v742 = vadd.f32 0.0, %v741
    %v743 = vpop.f32.mrf.mxu0
    %v744 = vpop.f32.mrf.mxu0
    %v745 = vadd.f32 0.0, %v744
    %v746 = vpop.f32.mrf.mxu0
    %747 = vmatprep.mubr.bf16.mxu0 %v628
    %748 = vmatmul.mubr.bf16.gmra.mxu0 %v627
    %v749 = vpop.f32.mrf.mxu0
    %v750 = vadd.f32 0.0, %v749
    %v751 = vpop.f32.mrf.mxu0
    %v752 = vpop.f32.mrf.mxu0
    %v753 = vadd.f32 0.0, %v752
    %v754 = vpop.f32.mrf.mxu0
    %755 = vmatprep.mubr.bf16.mxu0 %v630
    %756 = vmatmul.mubr.bf16.gmra.mxu0 %v629
    %v757 = vpop.f32.mrf.mxu0
    %v758 = vadd.f32 0.0, %v757
    %v759 = vpop.f32.mrf.mxu0
    %v760 = vpop.f32.mrf.mxu0
    %v761 = vadd.f32 0.0, %v760
    %v762 = vpop.f32.mrf.mxu0
    %763 = vmatprep.mubr.bf16.mxu0 %v632
    %764 = vmatmul.mubr.bf16.gmra.mxu0 %v631
    %v765 = vpop.f32.mrf.mxu0
    %v766 = vadd.f32 0.0, %v765
    %v767 = vpop.f32.mrf.mxu0
    %v768 = vpop.f32.mrf.mxu0
    %v769 = vadd.f32 0.0, %v768
    %v770 = vpop.f32.mrf.mxu0
    %771 = vmatprep.mubr.bf16.mxu0 %v634
    %772 = vmatmul.mubr.bf16.gmra.mxu0 %v633
    %v773 = vpop.f32.mrf.mxu0
    %v774 = vadd.f32 0.0, %v773
    %v775 = vpop.f32.mrf.mxu0
    %v776 = vpop.f32.mrf.mxu0
    %v777 = vadd.f32 0.0, %v776
    %v778 = vpop.f32.mrf.mxu0
    %779 = vmatprep.mubr.bf16.mxu0 %v636
    %780 = vmatmul.mubr.bf16.gmra.mxu0 %v635
    %v781 = vpop.f32.mrf.mxu0
    %v782 = vadd.f32 0.0, %v781
    %v783 = vpop.f32.mrf.mxu0
    %v784 = vpop.f32.mrf.mxu0
    %v785 = vadd.f32 0.0, %v784
    %v786 = vpop.f32.mrf.mxu0
    %787 = vmatprep.mubr.bf16.mxu0 %v638
    %788 = vmatmul.mubr.bf16.gmra.mxu0 %v637
    %v789 = vpop.f32.mrf.mxu0
    %v790 = vadd.f32 0.0, %v789
    %v791 = vpop.f32.mrf.mxu0
    %v792 = vpop.f32.mrf.mxu0
    %v793 = vadd.f32 0.0, %v792
    %v794 = vpop.f32.mrf.mxu0
    %795 = vmatprep.mubr.bf16.mxu0 %v640
    %796 = vmatmul.mubr.bf16.gmra.mxu0 %v639
    %v797 = vpop.f32.mrf.mxu0
    %v798 = vadd.f32 0.0, %v797
    %v799 = vpop.f32.mrf.mxu0
    %v800 = vpop.f32.mrf.mxu0
    %v801 = vadd.f32 0.0, %v800
    %v802 = vpop.f32.mrf.mxu0
    %803 = vmatprep.mubr.bf16.mxu0 %v642
    %804 = vmatmul.mubr.bf16.gmra.mxu0 %v641
    %v805 = vpop.f32.mrf.mxu0
    %v806 = vadd.f32 0.0, %v805
    %v807 = vpop.f32.mrf.mxu0
    %v808 = vpop.f32.mrf.mxu0
    %v809 = vadd.f32 0.0, %v808
    %v810 = vpop.f32.mrf.mxu0
    %811 = vmatprep.mubr.bf16.mxu0 %v644
    %812 = vmatmul.mubr.bf16.gmra.mxu0 %v643
    %v813 = vpop.f32.mrf.mxu0
    %v814 = vadd.f32 0.0, %v813
    %v815 = vpop.f32.mrf.mxu0
    %v816 = vpop.f32.mrf.mxu0
    %v817 = vadd.f32 0.0, %v816
    %v818 = vpop.f32.mrf.mxu0
    %819 = vmatprep.mubr.bf16.mxu0 %v646
    %820 = vmatmul.mubr.bf16.gmra.mxu0 %v645
    %v821 = vpop.f32.mrf.mxu0
    %v822 = vadd.f32 0.0, %v821
    %v823 = vpop.f32.mrf.mxu0
    %v824 = vpop.f32.mrf.mxu0
    %v825 = vadd.f32 0.0, %v824
    %v826 = vpop.f32.mrf.mxu0
    %827 = vmatprep.mubr.bf16.mxu0 %v648
    %828 = vmatmul.mubr.bf16.gmra.mxu0 %v647
    %v829 = vpop.f32.mrf.mxu0
    %v830 = vadd.f32 0.0, %v829
    %v831 = vpop.f32.mrf.mxu0
    %v832 = vpop.f32.mrf.mxu0
    %v833 = vadd.f32 0.0, %v832
    %v834 = vpop.f32.mrf.mxu0
    %835 = vmatprep.mubr.bf16.mxu0 %v650
    %836 = vmatmul.mubr.bf16.gmra.mxu0 %v649
    %v837 = vpop.f32.mrf.mxu0
    %v838 = vadd.f32 0.0, %v837
    %v839 = vpop.f32.mrf.mxu0
    %v840 = vpop.f32.mrf.mxu0
    %v841 = vadd.f32 0.0, %v840
    %v842 = vpop.f32.mrf.mxu0
    %843 = vdwg.mxu0
    %v844 = vpack.c.bf16 %v721, %v718
    %v845 = vpack.c.bf16 %v729, %v726
    %v846 = vpack.c.bf16 %v737, %v734
    %v847 = vpack.c.bf16 %v745, %v742
    %v848 = vpack.c.bf16 %v753, %v750
    %v849 = vpack.c.bf16 %v761, %v758
    %v850 = vpack.c.bf16 %v769, %v766
    %v851 = vpack.c.bf16 %v777, %v774
    %v852 = vpack.c.bf16 %v785, %v782
    %v853 = vpack.c.bf16 %v793, %v790
    %v854 = vpack.c.bf16 %v801, %v798
    %v855 = vpack.c.bf16 %v809, %v806
    %v856 = vpack.c.bf16 %v817, %v814
    %v857 = vpack.c.bf16 %v825, %v822
    %v858 = vpack.c.bf16 %v833, %v830
    %v859 = vpack.c.bf16 %v841, %v838
    %v860 = vld [vmem:[#allocation8] sm:$0xf]
    %v861 = vld [vmem:[#allocation8 + $0x4] sm:$0xf]
    %v862 = vld [vmem:[#allocation8 + $0x8] sm:$0xf]
    %v863 = vld [vmem:[#allocation8 + $0xc] sm:$0xf]
    %v864 = vld [vmem:[#allocation8 + $0x10] sm:$0xf]
    %v865 = vld [vmem:[#allocation8 + $0x14] sm:$0xf]
    %v866 = vld [vmem:[#allocation8 + $0x18] sm:$0xf]
    %v867 = vld [vmem:[#allocation8 + $0x1c] sm:$0xf]
    %v868 = vld [vmem:[#allocation8 + $0x20] sm:$0xf]
    %v869 = vld [vmem:[#allocation8 + $0x24] sm:$0xf]
    %v870 = vld [vmem:[#allocation8 + $0x28] sm:$0xf]
    %v871 = vld [vmem:[#allocation8 + $0x2c] sm:$0xf]
    %v872 = vld [vmem:[#allocation8 + $0x30] sm:$0xf]
    %v873 = vld [vmem:[#allocation8 + $0x34] sm:$0xf]
    %v874 = vld [vmem:[#allocation8 + $0x38] sm:$0xf]
    %v875 = vld [vmem:[#allocation8 + $0x3c] sm:$0xf]
    %v892 = vunpack.c.l.b16 %v860
    %v893 = vunpack.c.l.b16 %v861
    %v894 = vunpack.c.l.b16 %v862
    %v895 = vunpack.c.l.b16 %v863
    %v896 = vunpack.c.l.b16 %v864
    %v897 = vunpack.c.l.b16 %v865
    %v898 = vunpack.c.l.b16 %v866
    %v899 = vunpack.c.l.b16 %v867
    %v900 = vunpack.c.l.b16 %v868
    %v901 = vunpack.c.l.b16 %v869
    %v902 = vunpack.c.l.b16 %v870
    %v903 = vunpack.c.l.b16 %v871
    %v904 = vunpack.c.l.b16 %v872
    %v905 = vunpack.c.l.b16 %v873
    %v906 = vunpack.c.l.b16 %v874
    %v907 = vunpack.c.l.b16 %v875
    %v908 = vpack.c.b16 %v893, %v892
    %v909 = vpack.c.b16 %v895, %v894
    %v910 = vpack.c.b16 %v897, %v896
    %v911 = vpack.c.b16 %v899, %v898
    %v912 = vpack.c.b16 %v901, %v900
    %v913 = vpack.c.b16 %v903, %v902
    %v914 = vpack.c.b16 %v905, %v904
    %v915 = vpack.c.b16 %v907, %v906
    %924 = vmatprep.subr.bf16.mxu0 0
    %925 = vmatpush1.bf16.msra.mxu0 %v915
    %926 = vmatprep.subr.bf16.mxu0 0
    %927 = vmatpush1.bf16.msra.mxu0 %v914
    %928 = vmatprep.subr.bf16.mxu0 0
    %929 = vmatpush1.bf16.msra.mxu0 %v913
    %930 = vmatprep.subr.bf16.mxu0 0
    %931 = vmatpush1.bf16.msra.mxu0 %v912
    %932 = vmatprep.subr.bf16.mxu0 0
    %933 = vmatpush1.bf16.msra.mxu0 %v911
    %934 = vmatprep.subr.bf16.mxu0 0
    %935 = vmatpush1.bf16.msra.mxu0 %v910
    %936 = vmatprep.subr.bf16.mxu0 0
    %937 = vmatpush1.bf16.msra.mxu0 %v909
    %938 = vmatprep.subr.bf16.mxu0 0
    %939 = vmatpush1.bf16.msra.mxu0 %v908
    %940 = vmatprep.subr.bf16.mxu0 0
    %941 = vmatpush2.bf16.msra.mxu0 0
    %942 = vmatprep.subr.bf16.mxu0 0
    %943 = vmatpush2.bf16.msra.mxu0 0
    %944 = vmatprep.subr.bf16.mxu0 0
    %945 = vmatpush2.bf16.msra.mxu0 0
    %946 = vmatprep.subr.bf16.mxu0 0
    %947 = vmatpush2.bf16.msra.mxu0 0
    %948 = vmatprep.subr.bf16.mxu0 0
    %949 = vmatpush2.bf16.msra.mxu0 0
    %950 = vmatprep.subr.bf16.mxu0 0
    %951 = vmatpush2.bf16.msra.mxu0 0
    %952 = vmatprep.subr.bf16.mxu0 0
    %953 = vmatpush2.bf16.msra.mxu0 0
    %954 = vmatprep.subr.bf16.mxu0 0
    %955 = vmatpush2.bf16.msra.mxu0 0
    %956 = vmatprep.mubr.bf16.mxu0 0
    %957 = vmatmul.mubr.bf16.gmra.mxu0 %v844
    %v958 = vpop.f32.mrf.mxu0
    %v959 = vadd.f32 0.0, %v958
    %v960 = vpop.f32.mrf.mxu0
    %v961 = vpop.f32.mrf.mxu0
    %v962 = vadd.f32 0.0, %v961
    %v963 = vpop.f32.mrf.mxu0
    %964 = vmatprep.mubr.bf16.mxu0 0
    %965 = vmatmul.mubr.bf16.gmra.mxu0 %v845
    %v966 = vpop.f32.mrf.mxu0
    %v967 = vadd.f32 0.0, %v966
    %v968 = vpop.f32.mrf.mxu0
    %v969 = vpop.f32.mrf.mxu0
    %v970 = vadd.f32 0.0, %v969
    %v971 = vpop.f32.mrf.mxu0
    %972 = vmatprep.mubr.bf16.mxu0 0
    %973 = vmatmul.mubr.bf16.gmra.mxu0 %v846
    %v974 = vpop.f32.mrf.mxu0
    %v975 = vadd.f32 0.0, %v974
    %v976 = vpop.f32.mrf.mxu0
    %v977 = vpop.f32.mrf.mxu0
    %v978 = vadd.f32 0.0, %v977
    %v979 = vpop.f32.mrf.mxu0
    %980 = vmatprep.mubr.bf16.mxu0 0
    %981 = vmatmul.mubr.bf16.gmra.mxu0 %v847
    %v982 = vpop.f32.mrf.mxu0
    %v983 = vadd.f32 0.0, %v982
    %v984 = vpop.f32.mrf.mxu0
    %v985 = vpop.f32.mrf.mxu0
    %v986 = vadd.f32 0.0, %v985
    %v987 = vpop.f32.mrf.mxu0
    %988 = vmatprep.mubr.bf16.mxu0 0
    %989 = vmatmul.mubr.bf16.gmra.mxu0 %v848
    %v990 = vpop.f32.mrf.mxu0
    %v991 = vadd.f32 0.0, %v990
    %v992 = vpop.f32.mrf.mxu0
    %v993 = vpop.f32.mrf.mxu0
    %v994 = vadd.f32 0.0, %v993
    %v995 = vpop.f32.mrf.mxu0
    %996 = vmatprep.mubr.bf16.mxu0 0
    %997 = vmatmul.mubr.bf16.gmra.mxu0 %v849
    %v998 = vpop.f32.mrf.mxu0
    %v999 = vadd.f32 0.0, %v998
    %v1000 = vpop.f32.mrf.mxu0
    %v1001 = vpop.f32.mrf.mxu0
    %v1002 = vadd.f32 0.0, %v1001
    %v1003 = vpop.f32.mrf.mxu0
    %1004 = vmatprep.mubr.bf16.mxu0 0
    %1005 = vmatmul.mubr.bf16.gmra.mxu0 %v850
    %v1006 = vpop.f32.mrf.mxu0
    %v1007 = vadd.f32 0.0, %v1006
    %v1008 = vpop.f32.mrf.mxu0
    %v1009 = vpop.f32.mrf.mxu0
    %v1010 = vadd.f32 0.0, %v1009
    %v1011 = vpop.f32.mrf.mxu0
    %1012 = vmatprep.mubr.bf16.mxu0 0
    %1013 = vmatmul.mubr.bf16.gmra.mxu0 %v851
    %v1014 = vpop.f32.mrf.mxu0
    %v1015 = vadd.f32 0.0, %v1014
    %v1016 = vpop.f32.mrf.mxu0
    %v1017 = vpop.f32.mrf.mxu0
    %v1018 = vadd.f32 0.0, %v1017
    %v1019 = vpop.f32.mrf.mxu0
    %1020 = vmatprep.mubr.bf16.mxu0 0
    %1021 = vmatmul.mubr.bf16.gmra.mxu0 %v852
    %v1022 = vpop.f32.mrf.mxu0
    %v1023 = vadd.f32 0.0, %v1022
    %v1024 = vpop.f32.mrf.mxu0
    %v1025 = vpop.f32.mrf.mxu0
    %v1026 = vadd.f32 0.0, %v1025
    %v1027 = vpop.f32.mrf.mxu0
    %1028 = vmatprep.mubr.bf16.mxu0 0
    %1029 = vmatmul.mubr.bf16.gmra.mxu0 %v853
    %v1030 = vpop.f32.mrf.mxu0
    %v1031 = vadd.f32 0.0, %v1030
    %v1032 = vpop.f32.mrf.mxu0
    %v1033 = vpop.f32.mrf.mxu0
    %v1034 = vadd.f32 0.0, %v1033
    %v1035 = vpop.f32.mrf.mxu0
    %1036 = vmatprep.mubr.bf16.mxu0 0
    %1037 = vmatmul.mubr.bf16.gmra.mxu0 %v854
    %v1038 = vpop.f32.mrf.mxu0
    %v1039 = vadd.f32 0.0, %v1038
    %v1040 = vpop.f32.mrf.mxu0
    %v1041 = vpop.f32.mrf.mxu0
    %v1042 = vadd.f32 0.0, %v1041
    %v1043 = vpop.f32.mrf.mxu0
    %1044 = vmatprep.mubr.bf16.mxu0 0
    %1045 = vmatmul.mubr.bf16.gmra.mxu0 %v855
    %v1046 = vpop.f32.mrf.mxu0
    %v1047 = vadd.f32 0.0, %v1046
    %v1048 = vpop.f32.mrf.mxu0
    %v1049 = vpop.f32.mrf.mxu0
    %v1050 = vadd.f32 0.0, %v1049
    %v1051 = vpop.f32.mrf.mxu0
    %1052 = vmatprep.mubr.bf16.mxu0 0
    %1053 = vmatmul.mubr.bf16.gmra.mxu0 %v856
    %v1054 = vpop.f32.mrf.mxu0
    %v1055 = vadd.f32 0.0, %v1054
    %v1056 = vpop.f32.mrf.mxu0
    %v1057 = vpop.f32.mrf.mxu0
    %v1058 = vadd.f32 0.0, %v1057
    %v1059 = vpop.f32.mrf.mxu0
    %1060 = vmatprep.mubr.bf16.mxu0 0
    %1061 = vmatmul.mubr.bf16.gmra.mxu0 %v857
    %v1062 = vpop.f32.mrf.mxu0
    %v1063 = vadd.f32 0.0, %v1062
    %v1064 = vpop.f32.mrf.mxu0
    %v1065 = vpop.f32.mrf.mxu0
    %v1066 = vadd.f32 0.0, %v1065
    %v1067 = vpop.f32.mrf.mxu0
    %1068 = vmatprep.mubr.bf16.mxu0 0
    %1069 = vmatmul.mubr.bf16.gmra.mxu0 %v858
    %v1070 = vpop.f32.mrf.mxu0
    %v1071 = vadd.f32 0.0, %v1070
    %v1072 = vpop.f32.mrf.mxu0
    %v1073 = vpop.f32.mrf.mxu0
    %v1074 = vadd.f32 0.0, %v1073
    %v1075 = vpop.f32.mrf.mxu0
    %1076 = vmatprep.mubr.bf16.mxu0 0
    %1077 = vmatmul.mubr.bf16.gmra.mxu0 %v859
    %v1078 = vpop.f32.mrf.mxu0
    %v1079 = vadd.f32 0.0, %v1078
    %v1080 = vpop.f32.mrf.mxu0
    %v1081 = vpop.f32.mrf.mxu0
    %v1082 = vadd.f32 0.0, %v1081
    %v1083 = vpop.f32.mrf.mxu0
    %1084 = vdwg.mxu0
    %v1085 = vtanh.pop %v959
    %v1086 = vtanh.pop %v962
    %v1087 = vtanh.pop %v967
    %v1088 = vtanh.pop %v970
    %v1089 = vtanh.pop %v975
    %v1090 = vtanh.pop %v978
    %v1091 = vtanh.pop %v983
    %v1092 = vtanh.pop %v986
    %v1093 = vtanh.pop %v991
    %v1094 = vtanh.pop %v994
    %v1095 = vtanh.pop %v999
    %v1096 = vtanh.pop %v1002
    %v1097 = vtanh.pop %v1007
    %v1098 = vtanh.pop %v1010
    %v1099 = vtanh.pop %v1015
    %v1100 = vtanh.pop %v1018
    %v1101 = vtanh.pop %v1023
    %v1102 = vtanh.pop %v1026
    %v1103 = vtanh.pop %v1031
    %v1104 = vtanh.pop %v1034
    %v1105 = vtanh.pop %v1039
    %v1106 = vtanh.pop %v1042
    %v1107 = vtanh.pop %v1047
    %v1108 = vtanh.pop %v1050
    %v1109 = vtanh.pop %v1055
    %v1110 = vtanh.pop %v1058
    %v1111 = vtanh.pop %v1063
    %v1112 = vtanh.pop %v1066
    %v1113 = vtanh.pop %v1071
    %v1114 = vtanh.pop %v1074
    %v1115 = vtanh.pop %v1079
    %v1116 = vtanh.pop %v1082
    %v1117 = vpack.c.bf16 %v1086, %v1085
    %v1118 = vpack.c.bf16 %v1088, %v1087
    %v1119 = vpack.c.bf16 %v1090, %v1089
    %v1120 = vpack.c.bf16 %v1092, %v1091
    %v1121 = vpack.c.bf16 %v1094, %v1093
    %v1122 = vpack.c.bf16 %v1096, %v1095
    %v1123 = vpack.c.bf16 %v1098, %v1097
    %v1124 = vpack.c.bf16 %v1100, %v1099
    %v1125 = vpack.c.bf16 %v1102, %v1101
    %v1126 = vpack.c.bf16 %v1104, %v1103
    %v1127 = vpack.c.bf16 %v1106, %v1105
    %v1128 = vpack.c.bf16 %v1108, %v1107
    %v1129 = vpack.c.bf16 %v1110, %v1109
    %v1130 = vpack.c.bf16 %v1112, %v1111
    %v1131 = vpack.c.bf16 %v1114, %v1113
    %v1132 = vpack.c.bf16 %v1116, %v1115
    %1133 = vmatprep.subr.bf16.mxu0 0
    %1134 = vmatpush1.bf16.msra.mxu0 %v1124
    %1135 = vmatprep.subr.bf16.mxu0 0
    %1136 = vmatpush1.bf16.msra.mxu0 %v1123
    %1137 = vmatprep.subr.bf16.mxu0 0
    %1138 = vmatpush1.bf16.msra.mxu0 %v1122
    %1139 = vmatprep.subr.bf16.mxu0 0
    %1140 = vmatpush1.bf16.msra.mxu0 %v1121
    %1141 = vmatprep.subr.bf16.mxu0 0
    %1142 = vmatpush1.bf16.msra.mxu0 %v1120
    %1143 = vmatprep.subr.bf16.mxu0 0
    %1144 = vmatpush1.bf16.msra.mxu0 %v1119
    %1145 = vmatprep.subr.bf16.mxu0 0
    %1146 = vmatpush1.bf16.msra.mxu0 %v1118
    %1147 = vmatprep.subr.bf16.mxu0 0
    %1148 = vmatpush1.bf16.msra.mxu0 %v1117
    %1149 = vmatprep.subr.bf16.mxu0 0
    %1150 = vmatpush2.bf16.msra.mxu0 %v1132
    %1151 = vmatprep.subr.bf16.mxu0 0
    %1152 = vmatpush2.bf16.msra.mxu0 %v1131
    %1153 = vmatprep.subr.bf16.mxu0 0
    %1154 = vmatpush2.bf16.msra.mxu0 %v1130
    %1155 = vmatprep.subr.bf16.mxu0 0
    %1156 = vmatpush2.bf16.msra.mxu0 %v1129
    %1157 = vmatprep.subr.bf16.mxu0 0
    %1158 = vmatpush2.bf16.msra.mxu0 %v1128
    %1159 = vmatprep.subr.bf16.mxu0 0
    %1160 = vmatpush2.bf16.msra.mxu0 %v1127
    %1161 = vmatprep.subr.bf16.mxu0 0
    %1162 = vmatpush2.bf16.msra.mxu0 %v1126
    %1163 = vmatprep.subr.bf16.mxu0 0
    %1164 = vmatpush2.bf16.msra.mxu0 %v1125
    %1165 = vmatprep.mubr.bf16.mxu0 %v620
    %1166 = vmatmul.mubr.bf16.gmra.mxu0 %v619
    %v1167 = vpop.f32.mrf.mxu0
    %v1168 = vadd.f32 0.0, %v1167
    %v1169 = vpop.f32.mrf.mxu0
    %v1170 = vpop.f32.mrf.mxu0
    %v1171 = vadd.f32 0.0, %v1170
    %v1172 = vpop.f32.mrf.mxu0
    %1173 = vmatprep.mubr.bf16.mxu0 %v622
    %1174 = vmatmul.mubr.bf16.gmra.mxu0 %v621
    %v1175 = vpop.f32.mrf.mxu0
    %v1176 = vadd.f32 0.0, %v1175
    %v1177 = vpop.f32.mrf.mxu0
    %v1178 = vpop.f32.mrf.mxu0
    %v1179 = vadd.f32 0.0, %v1178
    %v1180 = vpop.f32.mrf.mxu0
    %1181 = vmatprep.mubr.bf16.mxu0 %v624
    %1182 = vmatmul.mubr.bf16.gmra.mxu0 %v623
    %v1183 = vpop.f32.mrf.mxu0
    %v1184 = vadd.f32 0.0, %v1183
    %v1185 = vpop.f32.mrf.mxu0
    %v1186 = vpop.f32.mrf.mxu0
    %v1187 = vadd.f32 0.0, %v1186
    %v1188 = vpop.f32.mrf.mxu0
    %1189 = vmatprep.mubr.bf16.mxu0 %v626
    %1190 = vmatmul.mubr.bf16.gmra.mxu0 %v625
    %v1191 = vpop.f32.mrf.mxu0
    %v1192 = vadd.f32 0.0, %v1191
    %v1193 = vpop.f32.mrf.mxu0
    %v1194 = vpop.f32.mrf.mxu0
    %v1195 = vadd.f32 0.0, %v1194
    %v1196 = vpop.f32.mrf.mxu0
    %1197 = vmatprep.mubr.bf16.mxu0 %v628
    %1198 = vmatmul.mubr.bf16.gmra.mxu0 %v627
    %v1199 = vpop.f32.mrf.mxu0
    %v1200 = vadd.f32 0.0, %v1199
    %v1201 = vpop.f32.mrf.mxu0
    %v1202 = vpop.f32.mrf.mxu0
    %v1203 = vadd.f32 0.0, %v1202
    %v1204 = vpop.f32.mrf.mxu0
    %1205 = vmatprep.mubr.bf16.mxu0 %v630
    %1206 = vmatmul.mubr.bf16.gmra.mxu0 %v629
    %v1207 = vpop.f32.mrf.mxu0
    %v1208 = vadd.f32 0.0, %v1207
    %v1209 = vpop.f32.mrf.mxu0
    %v1210 = vpop.f32.mrf.mxu0
    %v1211 = vadd.f32 0.0, %v1210
    %v1212 = vpop.f32.mrf.mxu0
    %1213 = vmatprep.mubr.bf16.mxu0 %v632
    %1214 = vmatmul.mubr.bf16.gmra.mxu0 %v631
    %v1215 = vpop.f32.mrf.mxu0
    %v1216 = vadd.f32 0.0, %v1215
    %v1217 = vpop.f32.mrf.mxu0
    %v1218 = vpop.f32.mrf.mxu0
    %v1219 = vadd.f32 0.0, %v1218
    %v1220 = vpop.f32.mrf.mxu0
    %1221 = vmatprep.mubr.bf16.mxu0 %v634
    %1222 = vmatmul.mubr.bf16.gmra.mxu0 %v633
    %v1223 = vpop.f32.mrf.mxu0
    %v1224 = vadd.f32 0.0, %v1223
    %v1225 = vpop.f32.mrf.mxu0
    %v1226 = vpop.f32.mrf.mxu0
    %v1227 = vadd.f32 0.0, %v1226
    %v1228 = vpop.f32.mrf.mxu0
    %1229 = vmatprep.mubr.bf16.mxu0 %v636
    %1230 = vmatmul.mubr.bf16.gmra.mxu0 %v635
    %v1231 = vpop.f32.mrf.mxu0
    %v1232 = vadd.f32 0.0, %v1231
    %v1233 = vpop.f32.mrf.mxu0
    %v1234 = vpop.f32.mrf.mxu0
    %v1235 = vadd.f32 0.0, %v1234
    %v1236 = vpop.f32.mrf.mxu0
    %1237 = vmatprep.mubr.bf16.mxu0 %v638
    %1238 = vmatmul.mubr.bf16.gmra.mxu0 %v637
    %v1239 = vpop.f32.mrf.mxu0
    %v1240 = vadd.f32 0.0, %v1239
    %v1241 = vpop.f32.mrf.mxu0
    %v1242 = vpop.f32.mrf.mxu0
    %v1243 = vadd.f32 0.0, %v1242
    %v1244 = vpop.f32.mrf.mxu0
    %1245 = vmatprep.mubr.bf16.mxu0 %v640
    %1246 = vmatmul.mubr.bf16.gmra.mxu0 %v639
    %v1247 = vpop.f32.mrf.mxu0
    %v1248 = vadd.f32 0.0, %v1247
    %v1249 = vpop.f32.mrf.mxu0
    %v1250 = vpop.f32.mrf.mxu0
    %v1251 = vadd.f32 0.0, %v1250
    %v1252 = vpop.f32.mrf.mxu0
    %1253 = vmatprep.mubr.bf16.mxu0 %v642
    %1254 = vmatmul.mubr.bf16.gmra.mxu0 %v641
    %v1255 = vpop.f32.mrf.mxu0
    %v1256 = vadd.f32 0.0, %v1255
    %v1257 = vpop.f32.mrf.mxu0
    %v1258 = vpop.f32.mrf.mxu0
    %v1259 = vadd.f32 0.0, %v1258
    %v1260 = vpop.f32.mrf.mxu0
    %1261 = vmatprep.mubr.bf16.mxu0 %v644
    %1262 = vmatmul.mubr.bf16.gmra.mxu0 %v643
    %v1263 = vpop.f32.mrf.mxu0
    %v1264 = vadd.f32 0.0, %v1263
    %v1265 = vpop.f32.mrf.mxu0
    %v1266 = vpop.f32.mrf.mxu0
    %v1267 = vadd.f32 0.0, %v1266
    %v1268 = vpop.f32.mrf.mxu0
    %1269 = vmatprep.mubr.bf16.mxu0 %v646
    %1270 = vmatmul.mubr.bf16.gmra.mxu0 %v645
    %v1271 = vpop.f32.mrf.mxu0
    %v1272 = vadd.f32 0.0, %v1271
    %v1273 = vpop.f32.mrf.mxu0
    %v1274 = vpop.f32.mrf.mxu0
    %v1275 = vadd.f32 0.0, %v1274
    %v1276 = vpop.f32.mrf.mxu0
    %1277 = vmatprep.mubr.bf16.mxu0 %v648
    %1278 = vmatmul.mubr.bf16.gmra.mxu0 %v647
    %v1279 = vpop.f32.mrf.mxu0
    %v1280 = vadd.f32 0.0, %v1279
    %v1281 = vpop.f32.mrf.mxu0
    %v1282 = vpop.f32.mrf.mxu0
    %v1283 = vadd.f32 0.0, %v1282
    %v1284 = vpop.f32.mrf.mxu0
    %1285 = vmatprep.mubr.bf16.mxu0 %v650
    %1286 = vmatmul.mubr.bf16.gmra.mxu0 %v649
    %v1287 = vpop.f32.mrf.mxu0
    %v1288 = vadd.f32 0.0, %v1287
    %v1289 = vpop.f32.mrf.mxu0
    %v1290 = vpop.f32.mrf.mxu0
    %v1291 = vadd.f32 0.0, %v1290
    %v1292 = vpop.f32.mrf.mxu0
    %1293 = vdwg.mxu0
    %v1294 = vpack.c.bf16 %v1171, %v1168
    %v1295 = vpack.c.bf16 %v1179, %v1176
    %v1296 = vpack.c.bf16 %v1187, %v1184
    %v1297 = vpack.c.bf16 %v1195, %v1192
    %v1298 = vpack.c.bf16 %v1203, %v1200
    %v1299 = vpack.c.bf16 %v1211, %v1208
    %v1300 = vpack.c.bf16 %v1219, %v1216
    %v1301 = vpack.c.bf16 %v1227, %v1224
    %v1302 = vpack.c.bf16 %v1235, %v1232
    %v1303 = vpack.c.bf16 %v1243, %v1240
    %v1304 = vpack.c.bf16 %v1251, %v1248
    %v1305 = vpack.c.bf16 %v1259, %v1256
    %v1306 = vpack.c.bf16 %v1267, %v1264
    %v1307 = vpack.c.bf16 %v1275, %v1272
    %v1308 = vpack.c.bf16 %v1283, %v1280
    %v1309 = vpack.c.bf16 %v1291, %v1288
    %v1310 = vld [vmem:[#allocation10] sm:$0xf]
    %v1311 = vld [vmem:[#allocation10 + $0x4] sm:$0xf]
    %v1312 = vld [vmem:[#allocation10 + $0x8] sm:$0xf]
    %v1313 = vld [vmem:[#allocation10 + $0xc] sm:$0xf]
    %v1314 = vld [vmem:[#allocation10 + $0x10] sm:$0xf]
    %v1315 = vld [vmem:[#allocation10 + $0x14] sm:$0xf]
    %v1316 = vld [vmem:[#allocation10 + $0x18] sm:$0xf]
    %v1317 = vld [vmem:[#allocation10 + $0x1c] sm:$0xf]
    %v1318 = vld [vmem:[#allocation10 + $0x20] sm:$0xf]
    %v1319 = vld [vmem:[#allocation10 + $0x24] sm:$0xf]
    %v1320 = vld [vmem:[#allocation10 + $0x28] sm:$0xf]
    %v1321 = vld [vmem:[#allocation10 + $0x2c] sm:$0xf]
    %v1322 = vld [vmem:[#allocation10 + $0x30] sm:$0xf]
    %v1323 = vld [vmem:[#allocation10 + $0x34] sm:$0xf]
    %v1324 = vld [vmem:[#allocation10 + $0x38] sm:$0xf]
    %v1325 = vld [vmem:[#allocation10 + $0x3c] sm:$0xf]
    %v1342 = vunpack.c.l.b16 %v1310
    %v1343 = vunpack.c.l.b16 %v1311
    %v1344 = vunpack.c.l.b16 %v1312
    %v1345 = vunpack.c.l.b16 %v1313
    %v1346 = vunpack.c.l.b16 %v1314
    %v1347 = vunpack.c.l.b16 %v1315
    %v1348 = vunpack.c.l.b16 %v1316
    %v1349 = vunpack.c.l.b16 %v1317
    %v1350 = vunpack.c.l.b16 %v1318
    %v1351 = vunpack.c.l.b16 %v1319
    %v1352 = vunpack.c.l.b16 %v1320
    %v1353 = vunpack.c.l.b16 %v1321
    %v1354 = vunpack.c.l.b16 %v1322
    %v1355 = vunpack.c.l.b16 %v1323
    %v1356 = vunpack.c.l.b16 %v1324
    %v1357 = vunpack.c.l.b16 %v1325
    %v1358 = vpack.c.b16 %v1343, %v1342
    %v1359 = vpack.c.b16 %v1345, %v1344
    %v1360 = vpack.c.b16 %v1347, %v1346
    %v1361 = vpack.c.b16 %v1349, %v1348
    %v1362 = vpack.c.b16 %v1351, %v1350
    %v1363 = vpack.c.b16 %v1353, %v1352
    %v1364 = vpack.c.b16 %v1355, %v1354
    %v1365 = vpack.c.b16 %v1357, %v1356
    %1374 = vmatprep.subr.bf16.mxu0 0
    %1375 = vmatpush1.bf16.msra.mxu0 %v1365
    %1376 = vmatprep.subr.bf16.mxu0 0
    %1377 = vmatpush1.bf16.msra.mxu0 %v1364
    %1378 = vmatprep.subr.bf16.mxu0 0
    %1379 = vmatpush1.bf16.msra.mxu0 %v1363
    %1380 = vmatprep.subr.bf16.mxu0 0
    %1381 = vmatpush1.bf16.msra.mxu0 %v1362
    %1382 = vmatprep.subr.bf16.mxu0 0
    %1383 = vmatpush1.bf16.msra.mxu0 %v1361
    %1384 = vmatprep.subr.bf16.mxu0 0
    %1385 = vmatpush1.bf16.msra.mxu0 %v1360
    %1386 = vmatprep.subr.bf16.mxu0 0
    %1387 = vmatpush1.bf16.msra.mxu0 %v1359
    %1388 = vmatprep.subr.bf16.mxu0 0
    %1389 = vmatpush1.bf16.msra.mxu0 %v1358
    %1390 = vmatprep.subr.bf16.mxu0 0
    %1391 = vmatpush2.bf16.msra.mxu0 0
    %1392 = vmatprep.subr.bf16.mxu0 0
    %1393 = vmatpush2.bf16.msra.mxu0 0
    %1394 = vmatprep.subr.bf16.mxu0 0
    %1395 = vmatpush2.bf16.msra.mxu0 0
    %1396 = vmatprep.subr.bf16.mxu0 0
    %1397 = vmatpush2.bf16.msra.mxu0 0
    %1398 = vmatprep.subr.bf16.mxu0 0
    %1399 = vmatpush2.bf16.msra.mxu0 0
    %1400 = vmatprep.subr.bf16.mxu0 0
    %1401 = vmatpush2.bf16.msra.mxu0 0
    %1402 = vmatprep.subr.bf16.mxu0 0
    %1403 = vmatpush2.bf16.msra.mxu0 0
    %1404 = vmatprep.subr.bf16.mxu0 0
    %1405 = vmatpush2.bf16.msra.mxu0 0
    %1406 = vmatprep.mubr.bf16.mxu0 0
    %1407 = vmatmul.mubr.bf16.gmra.mxu0 %v1294
    %v1408 = vpop.f32.mrf.mxu0
    %v1409 = vadd.f32 0.0, %v1408
    %v1410 = vpop.f32.mrf.mxu0
    %v1411 = vpop.f32.mrf.mxu0
    %v1412 = vadd.f32 0.0, %v1411
    %v1413 = vpop.f32.mrf.mxu0
    %1414 = vmatprep.mubr.bf16.mxu0 0
    %1415 = vmatmul.mubr.bf16.gmra.mxu0 %v1295
    %v1416 = vpop.f32.mrf.mxu0
    %v1417 = vadd.f32 0.0, %v1416
    %v1418 = vpop.f32.mrf.mxu0
    %v1419 = vpop.f32.mrf.mxu0
    %v1420 = vadd.f32 0.0, %v1419
    %v1421 = vpop.f32.mrf.mxu0
    %1422 = vmatprep.mubr.bf16.mxu0 0
    %1423 = vmatmul.mubr.bf16.gmra.mxu0 %v1296
    %v1424 = vpop.f32.mrf.mxu0
    %v1425 = vadd.f32 0.0, %v1424
    %v1426 = vpop.f32.mrf.mxu0
    %v1427 = vpop.f32.mrf.mxu0
    %v1428 = vadd.f32 0.0, %v1427
    %v1429 = vpop.f32.mrf.mxu0
    %1430 = vmatprep.mubr.bf16.mxu0 0
    %1431 = vmatmul.mubr.bf16.gmra.mxu0 %v1297
    %v1432 = vpop.f32.mrf.mxu0
    %v1433 = vadd.f32 0.0, %v1432
    %v1434 = vpop.f32.mrf.mxu0
    %v1435 = vpop.f32.mrf.mxu0
    %v1436 = vadd.f32 0.0, %v1435
    %v1437 = vpop.f32.mrf.mxu0
    %1438 = vmatprep.mubr.bf16.mxu0 0
    %1439 = vmatmul.mubr.bf16.gmra.mxu0 %v1298
    %v1440 = vpop.f32.mrf.mxu0
    %v1441 = vadd.f32 0.0, %v1440
    %v1442 = vpop.f32.mrf.mxu0
    %v1443 = vpop.f32.mrf.mxu0
    %v1444 = vadd.f32 0.0, %v1443
    %v1445 = vpop.f32.mrf.mxu0
    %1446 = vmatprep.mubr.bf16.mxu0 0
    %1447 = vmatmul.mubr.bf16.gmra.mxu0 %v1299
    %v1448 = vpop.f32.mrf.mxu0
    %v1449 = vadd.f32 0.0, %v1448
    %v1450 = vpop.f32.mrf.mxu0
    %v1451 = vpop.f32.mrf.mxu0
    %v1452 = vadd.f32 0.0, %v1451
    %v1453 = vpop.f32.mrf.mxu0
    %1454 = vmatprep.mubr.bf16.mxu0 0
    %1455 = vmatmul.mubr.bf16.gmra.mxu0 %v1300
    %v1456 = vpop.f32.mrf.mxu0
    %v1457 = vadd.f32 0.0, %v1456
    %v1458 = vpop.f32.mrf.mxu0
    %v1459 = vpop.f32.mrf.mxu0
    %v1460 = vadd.f32 0.0, %v1459
    %v1461 = vpop.f32.mrf.mxu0
    %1462 = vmatprep.mubr.bf16.mxu0 0
    %1463 = vmatmul.mubr.bf16.gmra.mxu0 %v1301
    %v1464 = vpop.f32.mrf.mxu0
    %v1465 = vadd.f32 0.0, %v1464
    %v1466 = vpop.f32.mrf.mxu0
    %v1467 = vpop.f32.mrf.mxu0
    %v1468 = vadd.f32 0.0, %v1467
    %v1469 = vpop.f32.mrf.mxu0
    %1470 = vmatprep.mubr.bf16.mxu0 0
    %1471 = vmatmul.mubr.bf16.gmra.mxu0 %v1302
    %v1472 = vpop.f32.mrf.mxu0
    %v1473 = vadd.f32 0.0, %v1472
    %v1474 = vpop.f32.mrf.mxu0
    %v1475 = vpop.f32.mrf.mxu0
    %v1476 = vadd.f32 0.0, %v1475
    %v1477 = vpop.f32.mrf.mxu0
    %1478 = vmatprep.mubr.bf16.mxu0 0
    %1479 = vmatmul.mubr.bf16.gmra.mxu0 %v1303
    %v1480 = vpop.f32.mrf.mxu0
    %v1481 = vadd.f32 0.0, %v1480
    %v1482 = vpop.f32.mrf.mxu0
    %v1483 = vpop.f32.mrf.mxu0
    %v1484 = vadd.f32 0.0, %v1483
    %v1485 = vpop.f32.mrf.mxu0
    %1486 = vmatprep.mubr.bf16.mxu0 0
    %1487 = vmatmul.mubr.bf16.gmra.mxu0 %v1304
    %v1488 = vpop.f32.mrf.mxu0
    %v1489 = vadd.f32 0.0, %v1488
    %v1490 = vpop.f32.mrf.mxu0
    %v1491 = vpop.f32.mrf.mxu0
    %v1492 = vadd.f32 0.0, %v1491
    %v1493 = vpop.f32.mrf.mxu0
    %1494 = vmatprep.mubr.bf16.mxu0 0
    %1495 = vmatmul.mubr.bf16.gmra.mxu0 %v1305
    %v1496 = vpop.f32.mrf.mxu0
    %v1497 = vadd.f32 0.0, %v1496
    %v1498 = vpop.f32.mrf.mxu0
    %v1499 = vpop.f32.mrf.mxu0
    %v1500 = vadd.f32 0.0, %v1499
    %v1501 = vpop.f32.mrf.mxu0
    %1502 = vmatprep.mubr.bf16.mxu0 0
    %1503 = vmatmul.mubr.bf16.gmra.mxu0 %v1306
    %v1504 = vpop.f32.mrf.mxu0
    %v1505 = vadd.f32 0.0, %v1504
    %v1506 = vpop.f32.mrf.mxu0
    %v1507 = vpop.f32.mrf.mxu0
    %v1508 = vadd.f32 0.0, %v1507
    %v1509 = vpop.f32.mrf.mxu0
    %1510 = vmatprep.mubr.bf16.mxu0 0
    %1511 = vmatmul.mubr.bf16.gmra.mxu0 %v1307
    %v1512 = vpop.f32.mrf.mxu0
    %v1513 = vadd.f32 0.0, %v1512
    %v1514 = vpop.f32.mrf.mxu0
    %v1515 = vpop.f32.mrf.mxu0
    %v1516 = vadd.f32 0.0, %v1515
    %v1517 = vpop.f32.mrf.mxu0
    %1518 = vmatprep.mubr.bf16.mxu0 0
    %1519 = vmatmul.mubr.bf16.gmra.mxu0 %v1308
    %v1520 = vpop.f32.mrf.mxu0
    %v1521 = vadd.f32 0.0, %v1520
    %v1522 = vpop.f32.mrf.mxu0
    %v1523 = vpop.f32.mrf.mxu0
    %v1524 = vadd.f32 0.0, %v1523
    %v1525 = vpop.f32.mrf.mxu0
    %1526 = vmatprep.mubr.bf16.mxu0 0
    %1527 = vmatmul.mubr.bf16.gmra.mxu0 %v1309
    %v1528 = vpop.f32.mrf.mxu0
    %v1529 = vadd.f32 0.0, %v1528
    %v1530 = vpop.f32.mrf.mxu0
    %v1531 = vpop.f32.mrf.mxu0
    %v1532 = vadd.f32 0.0, %v1531
    %v1533 = vpop.f32.mrf.mxu0
    %1534 = vdwg.mxu0
    %v1535 = vpack.c.bf16 %v1412, %v1409
    %v1536 = vpack.c.bf16 %v1420, %v1417
    %v1537 = vpack.c.bf16 %v1428, %v1425
    %v1538 = vpack.c.bf16 %v1436, %v1433
    %v1539 = vpack.c.bf16 %v1444, %v1441
    %v1540 = vpack.c.bf16 %v1452, %v1449
    %v1541 = vpack.c.bf16 %v1460, %v1457
    %v1542 = vpack.c.bf16 %v1468, %v1465
    %v1543 = vpack.c.bf16 %v1476, %v1473
    %v1544 = vpack.c.bf16 %v1484, %v1481
    %v1545 = vpack.c.bf16 %v1492, %v1489
    %v1546 = vpack.c.bf16 %v1500, %v1497
    %v1547 = vpack.c.bf16 %v1508, %v1505
    %v1548 = vpack.c.bf16 %v1516, %v1513
    %v1549 = vpack.c.bf16 %v1524, %v1521
    %v1550 = vpack.c.bf16 %v1532, %v1529
    %1551 = vmatprep.subr.bf16.mxu0 0
    %1552 = vmatpush1.bf16.msra.mxu0 %v1542
    %1553 = vmatprep.subr.bf16.mxu0 0
    %1554 = vmatpush1.bf16.msra.mxu0 %v1541
    %1555 = vmatprep.subr.bf16.mxu0 0
    %1556 = vmatpush1.bf16.msra.mxu0 %v1540
    %1557 = vmatprep.subr.bf16.mxu0 0
    %1558 = vmatpush1.bf16.msra.mxu0 %v1539
    %1559 = vmatprep.subr.bf16.mxu0 0
    %1560 = vmatpush1.bf16.msra.mxu0 %v1538
    %1561 = vmatprep.subr.bf16.mxu0 0
    %1562 = vmatpush1.bf16.msra.mxu0 %v1537
    %1563 = vmatprep.subr.bf16.mxu0 0
    %1564 = vmatpush1.bf16.msra.mxu0 %v1536
    %1565 = vmatprep.subr.bf16.mxu0 0
    %1566 = vmatpush1.bf16.msra.mxu0 %v1535
    %1567 = vmatprep.subr.bf16.mxu0 0
    %1568 = vmatpush2.bf16.msra.mxu0 %v1550
    %1569 = vmatprep.subr.bf16.mxu0 0
    %1570 = vmatpush2.bf16.msra.mxu0 %v1549
    %1571 = vmatprep.subr.bf16.mxu0 0
    %1572 = vmatpush2.bf16.msra.mxu0 %v1548
    %1573 = vmatprep.subr.bf16.mxu0 0
    %1574 = vmatpush2.bf16.msra.mxu0 %v1547
    %1575 = vmatprep.subr.bf16.mxu0 0
    %1576 = vmatpush2.bf16.msra.mxu0 %v1546
    %1577 = vmatprep.subr.bf16.mxu0 0
    %1578 = vmatpush2.bf16.msra.mxu0 %v1545
    %1579 = vmatprep.subr.bf16.mxu0 0
    %1580 = vmatpush2.bf16.msra.mxu0 %v1544
    %1581 = vmatprep.subr.bf16.mxu0 0
    %1582 = vmatpush2.bf16.msra.mxu0 %v1543
    %1583 = vmatprep.mubr.bf16.mxu0 %v620
    %1584 = vmatmul.mubr.bf16.gmra.mxu0 %v619
    %v1585 = vpop.f32.mrf.mxu0
    %v1586 = vadd.f32 0.0, %v1585
    %v1587 = vpop.f32.mrf.mxu0
    %v1588 = vpop.f32.mrf.mxu0
    %v1589 = vadd.f32 0.0, %v1588
    %v1590 = vpop.f32.mrf.mxu0
    %1591 = vmatprep.mubr.bf16.mxu0 %v622
    %1592 = vmatmul.mubr.bf16.gmra.mxu0 %v621
    %v1593 = vpop.f32.mrf.mxu0
    %v1594 = vadd.f32 0.0, %v1593
    %v1595 = vpop.f32.mrf.mxu0
    %v1596 = vpop.f32.mrf.mxu0
    %v1597 = vadd.f32 0.0, %v1596
    %v1598 = vpop.f32.mrf.mxu0
    %1599 = vmatprep.mubr.bf16.mxu0 %v624
    %1600 = vmatmul.mubr.bf16.gmra.mxu0 %v623
    %v1601 = vpop.f32.mrf.mxu0
    %v1602 = vadd.f32 0.0, %v1601
    %v1603 = vpop.f32.mrf.mxu0
    %v1604 = vpop.f32.mrf.mxu0
    %v1605 = vadd.f32 0.0, %v1604
    %v1606 = vpop.f32.mrf.mxu0
    %1607 = vmatprep.mubr.bf16.mxu0 %v626
    %1608 = vmatmul.mubr.bf16.gmra.mxu0 %v625
    %v1609 = vpop.f32.mrf.mxu0
    %v1610 = vadd.f32 0.0, %v1609
    %v1611 = vpop.f32.mrf.mxu0
    %v1612 = vpop.f32.mrf.mxu0
    %v1613 = vadd.f32 0.0, %v1612
    %v1614 = vpop.f32.mrf.mxu0
    %1615 = vmatprep.mubr.bf16.mxu0 %v628
    %1616 = vmatmul.mubr.bf16.gmra.mxu0 %v627
    %v1617 = vpop.f32.mrf.mxu0
    %v1618 = vadd.f32 0.0, %v1617
    %v1619 = vpop.f32.mrf.mxu0
    %v1620 = vpop.f32.mrf.mxu0
    %v1621 = vadd.f32 0.0, %v1620
    %v1622 = vpop.f32.mrf.mxu0
    %1623 = vmatprep.mubr.bf16.mxu0 %v630
    %1624 = vmatmul.mubr.bf16.gmra.mxu0 %v629
    %v1625 = vpop.f32.mrf.mxu0
    %v1626 = vadd.f32 0.0, %v1625
    %v1627 = vpop.f32.mrf.mxu0
    %v1628 = vpop.f32.mrf.mxu0
    %v1629 = vadd.f32 0.0, %v1628
    %v1630 = vpop.f32.mrf.mxu0
    %1631 = vmatprep.mubr.bf16.mxu0 %v632
    %1632 = vmatmul.mubr.bf16.gmra.mxu0 %v631
    %v1633 = vpop.f32.mrf.mxu0
    %v1634 = vadd.f32 0.0, %v1633
    %v1635 = vpop.f32.mrf.mxu0
    %v1636 = vpop.f32.mrf.mxu0
    %v1637 = vadd.f32 0.0, %v1636
    %v1638 = vpop.f32.mrf.mxu0
    %1639 = vmatprep.mubr.bf16.mxu0 %v634
    %1640 = vmatmul.mubr.bf16.gmra.mxu0 %v633
    %v1641 = vpop.f32.mrf.mxu0
    %v1642 = vadd.f32 0.0, %v1641
    %v1643 = vpop.f32.mrf.mxu0
    %v1644 = vpop.f32.mrf.mxu0
    %v1645 = vadd.f32 0.0, %v1644
    %v1646 = vpop.f32.mrf.mxu0
    %1647 = vmatprep.mubr.bf16.mxu0 %v636
    %1648 = vmatmul.mubr.bf16.gmra.mxu0 %v635
    %v1649 = vpop.f32.mrf.mxu0
    %v1650 = vadd.f32 0.0, %v1649
    %v1651 = vpop.f32.mrf.mxu0
    %v1652 = vpop.f32.mrf.mxu0
    %v1653 = vadd.f32 0.0, %v1652
    %v1654 = vpop.f32.mrf.mxu0
    %1655 = vmatprep.mubr.bf16.mxu0 %v638
    %1656 = vmatmul.mubr.bf16.gmra.mxu0 %v637
    %v1657 = vpop.f32.mrf.mxu0
    %v1658 = vadd.f32 0.0, %v1657
    %v1659 = vpop.f32.mrf.mxu0
    %v1660 = vpop.f32.mrf.mxu0
    %v1661 = vadd.f32 0.0, %v1660
    %v1662 = vpop.f32.mrf.mxu0
    %1663 = vmatprep.mubr.bf16.mxu0 %v640
    %1664 = vmatmul.mubr.bf16.gmra.mxu0 %v639
    %v1665 = vpop.f32.mrf.mxu0
    %v1666 = vadd.f32 0.0, %v1665
    %v1667 = vpop.f32.mrf.mxu0
    %v1668 = vpop.f32.mrf.mxu0
    %v1669 = vadd.f32 0.0, %v1668
    %v1670 = vpop.f32.mrf.mxu0
    %1671 = vmatprep.mubr.bf16.mxu0 %v642
    %1672 = vmatmul.mubr.bf16.gmra.mxu0 %v641
    %v1673 = vpop.f32.mrf.mxu0
    %v1674 = vadd.f32 0.0, %v1673
    %v1675 = vpop.f32.mrf.mxu0
    %v1676 = vpop.f32.mrf.mxu0
    %v1677 = vadd.f32 0.0, %v1676
    %v1678 = vpop.f32.mrf.mxu0
    %1679 = vmatprep.mubr.bf16.mxu0 %v644
    %1680 = vmatmul.mubr.bf16.gmra.mxu0 %v643
    %v1681 = vpop.f32.mrf.mxu0
    %v1682 = vadd.f32 0.0, %v1681
    %v1683 = vpop.f32.mrf.mxu0
    %v1684 = vpop.f32.mrf.mxu0
    %v1685 = vadd.f32 0.0, %v1684
    %v1686 = vpop.f32.mrf.mxu0
    %1687 = vmatprep.mubr.bf16.mxu0 %v646
    %1688 = vmatmul.mubr.bf16.gmra.mxu0 %v645
    %v1689 = vpop.f32.mrf.mxu0
    %v1690 = vadd.f32 0.0, %v1689
    %v1691 = vpop.f32.mrf.mxu0
    %v1692 = vpop.f32.mrf.mxu0
    %v1693 = vadd.f32 0.0, %v1692
    %v1694 = vpop.f32.mrf.mxu0
    %1695 = vmatprep.mubr.bf16.mxu0 %v648
    %1696 = vmatmul.mubr.bf16.gmra.mxu0 %v647
    %v1697 = vpop.f32.mrf.mxu0
    %v1698 = vadd.f32 0.0, %v1697
    %v1699 = vpop.f32.mrf.mxu0
    %v1700 = vpop.f32.mrf.mxu0
    %v1701 = vadd.f32 0.0, %v1700
    %v1702 = vpop.f32.mrf.mxu0
    %1703 = vmatprep.mubr.bf16.mxu0 %v650
    %1704 = vmatmul.mubr.bf16.gmra.mxu0 %v649
    %v1705 = vpop.f32.mrf.mxu0
    %v1706 = vadd.f32 0.0, %v1705
    %v1707 = vpop.f32.mrf.mxu0
    %v1708 = vpop.f32.mrf.mxu0
    %v1709 = vadd.f32 0.0, %v1708
    %v1710 = vpop.f32.mrf.mxu0
    %1711 = vdwg.mxu0
    %1712 = vst [vmem:[#allocation11] sm:$0xff] %v1586
    %1713 = vst [vmem:[#allocation11 + $0x8] sm:$0xff] %v1589
    %1714 = vst [vmem:[#allocation11 + $0x10] sm:$0xff] %v1594
    %1715 = vst [vmem:[#allocation11 + $0x18] sm:$0xff] %v1597
    %1716 = vst [vmem:[#allocation11 + $0x20] sm:$0xff] %v1602
    %1717 = vst [vmem:[#allocation11 + $0x28] sm:$0xff] %v1605
    %1718 = vst [vmem:[#allocation11 + $0x30] sm:$0xff] %v1610
    %1719 = vst [vmem:[#allocation11 + $0x38] sm:$0xff] %v1613
    %1720 = vst [vmem:[#allocation11 + $0x40] sm:$0xff] %v1618
    %1721 = vst [vmem:[#allocation11 + $0x48] sm:$0xff] %v1621
    %1722 = vst [vmem:[#allocation11 + $0x50] sm:$0xff] %v1626
    %1723 = vst [vmem:[#allocation11 + $0x58] sm:$0xff] %v1629
    %1724 = vst [vmem:[#allocation11 + $0x60] sm:$0xff] %v1634
    %1725 = vst [vmem:[#allocation11 + $0x68] sm:$0xff] %v1637
    %1726 = vst [vmem:[#allocation11 + $0x70] sm:$0xff] %v1642
    %1727 = vst [vmem:[#allocation11 + $0x78] sm:$0xff] %v1645
    %1728 = vst [vmem:[#allocation11 + $0x80] sm:$0xff] %v1650
    %1729 = vst [vmem:[#allocation11 + $0x88] sm:$0xff] %v1653
    %1730 = vst [vmem:[#allocation11 + $0x90] sm:$0xff] %v1658
    %1731 = vst [vmem:[#allocation11 + $0x98] sm:$0xff] %v1661
    %1732 = vst [vmem:[#allocation11 + $0xa0] sm:$0xff] %v1666
    %1733 = vst [vmem:[#allocation11 + $0xa8] sm:$0xff] %v1669
    %1734 = vst [vmem:[#allocation11 + $0xb0] sm:$0xff] %v1674
    %1735 = vst [vmem:[#allocation11 + $0xb8] sm:$0xff] %v1677
    %1736 = vst [vmem:[#allocation11 + $0xc0] sm:$0xff] %v1682
    %1737 = vst [vmem:[#allocation11 + $0xc8] sm:$0xff] %v1685
    %1738 = vst [vmem:[#allocation11 + $0xd0] sm:$0xff] %v1690
    %1739 = vst [vmem:[#allocation11 + $0xd8] sm:$0xff] %v1693
    %1740 = vst [vmem:[#allocation11 + $0xe0] sm:$0xff] %v1698
    %1741 = vst [vmem:[#allocation11 + $0xe8] sm:$0xff] %v1701
    %1742 = vst [vmem:[#allocation11 + $0xf0] sm:$0xff] %v1706
    %1743 = vst [vmem:[#allocation11 + $0xf8] sm:$0xff] %v1709
    // Predicated region
    $region42: #{tpu_custom_call.1} parent=1 // pred_check
      _
    $region43: #{tpu_custom_call.1} parent=1 // pred_check_branch
      %1745 = sbr.rel (0) target = $region45
    $region44: #{tpu_custom_call.1} parent=1 // pred_region
      %s1747 = ssub.s32 4096, 4096
      %1748 = vsyncadd [#allocation4], %s1747
      %s1749 = sshll.u32 [#allocation11], 4
      %s1750 = int_to_ptr.vmem [resolvable:$true] %s1749
      %1755 = dma.vmem_to_hbm [thread:$0]  %s1750, 4096, %s5, [#allocation4], 128, 128, 8
    $region45: #{tpu_custom_call.1} parent=1 // pred_fallthru
      _
    // Predicated region
    $region46: #{tpu_custom_call.1} parent=1 // pred_check
      _
    $region47: #{tpu_custom_call.1} parent=1 // pred_check_branch
      %1757 = sbr.rel (0) target = $region49
    $region48: #{tpu_custom_call.1} parent=1 // pred_region
      %1758 = dma.done [#allocation4], 4096
    $region49: #{tpu_custom_call.1} parent=1 // pred_fallthru
      _
    %1759 = vsyncpa [#allocation3], 1
    %1760 = vsyncpa [#allocation6], 1
    %1761 = vsyncpa [#allocation9], 1
    %1762 = vsyncpa [#allocation4], 1

</llo_original>
